<compile_context>
chip_gen: v7x
topology: tpu7x:2x2x1
jax: 0.10.0
libtpu: 0.0.40
codegen_flags: <defaults>
</compile_context>

<pallas_src>
import inspect

import jax
import jax.numpy as jnp
import numpy as np
from jax import lax
from jax.experimental import pallas as pl
from jax.experimental.pallas import tpu as pltpu


def _round_up(x, m):
    return ((x + m - 1) // m) * m


def _cdiv(a, b):
    return -(-a // b)


# Single-buffer the loop-invariant weight blocks when this JAX supports
# pipeline_mode (reclaims the duplicate VMEM buffer; matters inside v7x 64 MiB).
_HAS_PIPELINE_MODE = (
    hasattr(pl, "Buffered")
    and "pipeline_mode" in inspect.signature(pl.BlockSpec).parameters
)


def _invariant_spec(shape):
    """BlockSpec for a grid-invariant (weight) input."""
    zeros = (0,) * len(shape)
    index_map = lambda bi, ti: zeros
    if _HAS_PIPELINE_MODE:
        return pl.BlockSpec(shape, index_map, pipeline_mode=pl.Buffered(1))
    return pl.BlockSpec(shape, index_map)


def _vmem_limit_bytes():
    """Generation-aware VMEM request (~85% of physical, capped at 112 MiB)."""
    cap = 64 * 1024 * 1024            # conservative default (v7x per-core)
    try:
        cap = int(pltpu.get_tpu_info().vmem_capacity_bytes)
    except Exception:
        pass
    return max(24 << 20, min(int(cap * 0.85), 112 << 20))


def _pick_batch_block(Bp, max_block=256):
    """Largest multiple of 8 dividing the padded batch, capped at 256 rows."""
    best = 8
    for d in range(8, min(Bp, max_block) + 1, 8):
        if Bp % d == 0:
            best = d
    return best


def _plan_time(T, bB, Ep, Hp, Dp, Cp, vmem_limit):
    """Pick (slab, tT, T_pad) from the VMEM budget.

    slab  : timesteps projected per MXU matmul into the (slab, bB, 4Hp) scratch
    tT    : timesteps per grid chunk (x double buffer sized to the budget)
    T_pad : T rounded up to a multiple of tT (extra steps are masked).
    """
    H4 = 4 * Hp
    # gx scratch capped at ~8 MiB, slab in [1, 32].
    slab = max(1, min(32, T, (8 << 20) // (bB * H4 * 4)))

    weight_bytes = (Ep * H4 + Hp * H4 + Hp * Dp + Dp * Cp) * 2 \
                   + (H4 + Dp + Cp) * 4
    weight_bufs = 1 if _HAS_PIPELINE_MODE else 2
    fixed = (weight_bufs * weight_bytes          # invariant weights
             + bB * Hp * (2 + 4)                 # h (bf16) + c (f32) carry
             + slab * bB * H4 * 4                # time-major gx scratch
             + 2 * bB * Cp * 4                   # out double buffer
             + (4 << 20))                        # compiler headroom
    per_step_x = bB * Ep * 2                     # bf16 bytes / timestep / buffer
    x_budget = max(vmem_limit - fixed, 2 * slab * per_step_x)
    max_steps = max(slab, x_budget // (2 * per_step_x))

    total_slabs = _cdiv(T, slab)
    max_slabs_per_chunk = max(1, min(int(max_steps) // slab, 16))
    n_chunks = _cdiv(total_slabs, max_slabs_per_chunk)
    n_slabs = _cdiv(total_slabs, n_chunks)       # balance chunks (min waste)
    tT = slab * n_slabs
    T_pad = _cdiv(T, tT) * tT
    return slab, tT, T_pad


def _build_kernel(*, T, tT, slab, Hp, needs_mask, split_batch):
    """Return the Pallas kernel body, closing over static tiling params."""
    n_slabs = tT // slab
    H4 = 4 * Hp

    def kernel(x_ref, wih_ref, whh_ref, b_ref, w1_ref, b1_ref, w2_ref, b2_ref,
               out_ref, h_scr, c_scr, gx_scr):
        # x_ref   : (tT, bB, Ep) bf16 time-major input chunk
        # wih_ref : (Ep, 4Hp) bf16, whh_ref: (Hp, 4Hp) bf16, b_ref: (1, 4Hp) f32
        # w1_ref  : (Hp, Dp) bf16, b1_ref: (1, Dp) f32
        # w2_ref  : (Dp, Cp) bf16, b2_ref: (1, Cp) f32
        # out_ref : (bB, Cp) f32 lane-dense logits slab
        # h_scr   : (bB, Hp) bf16 ; c_scr: (bB, Hp) f32 ; gx_scr: (slab,bB,4Hp) f32
        bB = h_scr.shape[0]
        half = bB // 2
        Ep = x_ref.shape[2]
        t_idx = pl.program_id(1)

        @pl.when(t_idx == 0)
        def _init():
            h_scr[...] = jnp.zeros_like(h_scr)
            c_scr[...] = jnp.zeros_like(c_scr)

        # Loop-invariant values: load from VMEM once per chunk.
        whh = whh_ref[...]                      # (Hp, 4Hp) bf16
        bias = b_ref[...]                       # (1, 4Hp)  f32

        def cell(gx_t, h, c):
            # h bf16, c f32, gx_t f32; gate slices are 128-lane aligned.
            gates = gx_t + jnp.dot(h, whh, preferred_element_type=jnp.float32)
            i_g = jax.nn.sigmoid(gates[:, 0 * Hp:1 * Hp])
            f_g = jax.nn.sigmoid(gates[:, 1 * Hp:2 * Hp])
            g_g = jnp.tanh(gates[:, 2 * Hp:3 * Hp])
            o_g = jax.nn.sigmoid(gates[:, 3 * Hp:4 * Hp])
            c_new = f_g * c + i_g * g_g
            h_new = (o_g * jnp.tanh(c_new)).astype(jnp.bfloat16)
            return h_new, c_new

        def slab_body(s, carry):
            # Project `slab` timesteps with ONE MXU matmul, stored time-major
            # so the serial loop reads contiguous (bB, 4Hp) tiles per step.
            start = pl.multiple_of(s * slab, slab)
            x_slab = x_ref[pl.ds(start, slab), :, :]            # (slab,bB,Ep)
            gx = (jnp.dot(x_slab.reshape(slab * bB, Ep), wih_ref[...],
                          preferred_element_type=jnp.float32) + bias)
            gx_scr[...] = gx.reshape(slab, bB, H4)

            def step(t, inner):
                gx_t = gx_scr[t]                                # (bB, 4Hp) f32
                if split_batch:
                    h0, h1, c0, c1 = inner
                    # Two independent half-batch cells -> ILP across the
                    # latency-bound MXU -> EUP -> VPU dependency chain.
                    nh0, nc0 = cell(gx_t[0:half, :], h0, c0)
                    nh1, nc1 = cell(gx_t[half:bB, :], h1, c1)
                    new = (nh0, nh1, nc0, nc1)
                else:
                    h, c = inner
                    nh, nc = cell(gx_t, h, c)
                    new = (nh, nc)
                if needs_mask:
                    # Zero-padded timesteps are NOT an LSTM no-op: hold state.
                    t_glob = t_idx * tT + s * slab + t
                    keep = t_glob < T
                    new = tuple(jnp.where(keep, n, o)
                                for n, o in zip(new, inner))
                return new

            return lax.fori_loop(0, slab, step, carry,
                                 unroll=True if slab <= 8 else 8)

        if split_batch:
            carry = (h_scr[0:half, :], h_scr[half:bB, :],
                     c_scr[0:half, :], c_scr[half:bB, :])
        else:
            carry = (h_scr[...], c_scr[...])

        carry = lax.fori_loop(0, n_slabs, slab_body, carry)

        if split_batch:
            h_scr[0:half, :] = carry[0]
            h_scr[half:bB, :] = carry[1]
            c_scr[0:half, :] = carry[2]
            c_scr[half:bB, :] = carry[3]
        else:
            h_scr[...] = carry[0]
            c_scr[...] = carry[1]

        # Classifier on the final hidden state, only on the last time chunk.
        @pl.when(t_idx == pl.num_programs(1) - 1)
        def _classify():
            h_last = h_scr[...]                                 # (bB, Hp) bf16
            z = (jnp.dot(h_last, w1_ref[...],
                         preferred_element_type=jnp.float32) + b1_ref[...])
            z = jnp.maximum(z, 0.0).astype(jnp.bfloat16)
            out_ref[...] = (jnp.dot(z, w2_ref[...],
                                    preferred_element_type=jnp.float32)
                            + b2_ref[...])

    return kernel


@jax.jit
def action_lstm_forward(features, params):
    """features: (B, T, E) batch_first, like the PyTorch module's forward."""
    B, T, E = features.shape
    H = params["w_hh"].shape[1]
    D = params["w1"].shape[0]          # classifier hidden width (128)
    C = params["w2"].shape[0]          # num classes

    Bp = _round_up(max(B, 8), 8)
    Ep = _round_up(E, 128)
    Hp = _round_up(H, 128)
    Dp = _round_up(D, 128)
    Cp = _round_up(C, 128)

    bB = _pick_batch_block(Bp)
    vmem_limit = _vmem_limit_bytes()
    slab, tT, T_pad = _plan_time(T, bB, Ep, Hp, Dp, Cp, vmem_limit)
    split_batch = (bB >= 16) and (bB % 16 == 0)
    needs_mask = (T_pad != T)

    f32, bf16 = jnp.float32, jnp.bfloat16

    # --- weights: pad each gate block H -> Hp so the [i,f,g,o] slices stay
    # 128-lane aligned. Padded hidden units provably stay exactly 0
    # (pre-activations 0 -> i=f=o=0.5, g=0 -> c=h=0; zero W_hh rows add nothing).
    w_ih = params["w_ih"].astype(f32).reshape(4, H, E)
    w_ih = jnp.pad(w_ih, ((0, 0), (0, Hp - H), (0, Ep - E)))
    w_ih = w_ih.reshape(4 * Hp, Ep).T.astype(bf16)               # (Ep, 4Hp)

    w_hh = params["w_hh"].astype(f32).reshape(4, H, H)
    w_hh = jnp.pad(w_hh, ((0, 0), (0, Hp - H), (0, Hp - H)))
    w_hh = w_hh.reshape(4 * Hp, Hp).T.astype(bf16)               # (Hp, 4Hp)

    b = (params["b_ih"] + params["b_hh"]).astype(f32).reshape(4, H)
    b = jnp.pad(b, ((0, 0), (0, Hp - H))).reshape(1, 4 * Hp)     # (1, 4Hp) f32

    w1 = jnp.pad(params["w1"].astype(f32).T,
                 ((0, Hp - H), (0, Dp - D))).astype(bf16)        # (Hp, Dp)
    b1 = jnp.pad(params["b1"].astype(f32), (0, Dp - D)).reshape(1, Dp)
    w2 = jnp.pad(params["w2"].astype(f32).T,
                 ((0, Dp - D), (0, Cp - C))).astype(bf16)        # (Dp, Cp)
    b2 = jnp.pad(params["b2"].astype(f32), (0, Cp - C)).reshape(1, Cp)

    # --- input: time-major (T_pad, Bp, Ep) so per-slab projections and the
    # per-step gate reads are contiguous; bf16 halves DMA bytes.
    x = jnp.transpose(features, (1, 0, 2)).astype(bf16)
    x = jnp.pad(x, ((0, T_pad - T), (0, Bp - B), (0, Ep - E)))

    kernel = _build_kernel(T=T, tT=tT, slab=slab, Hp=Hp,
                           needs_mask=needs_mask, split_batch=split_batch)

    grid = (Bp // bB, T_pad // tT)   # (parallel batch blocks, serial chunks)

    out = pl.pallas_call(
        kernel,
        out_shape=jax.ShapeDtypeStruct((Bp, Cp), jnp.float32),
        grid_spec=pltpu.PrefetchScalarGridSpec(
            num_scalar_prefetch=0,
            grid=grid,
            in_specs=[
                pl.BlockSpec((tT, bB, Ep), lambda bi, ti: (ti, bi, 0)),  # x
                _invariant_spec((Ep, 4 * Hp)),                           # W_ih
                _invariant_spec((Hp, 4 * Hp)),                           # W_hh
                _invariant_spec((1, 4 * Hp)),                            # bias
                _invariant_spec((Hp, Dp)),                               # W1
                _invariant_spec((1, Dp)),                                # b1
                _invariant_spec((Dp, Cp)),                               # W2
                _invariant_spec((1, Cp)),                                # b2
            ],
            out_specs=pl.BlockSpec((bB, Cp), lambda bi, ti: (bi, 0)),
            scratch_shapes=[
                pltpu.VMEM((bB, Hp), jnp.bfloat16),            # h carry
                pltpu.VMEM((bB, Hp), jnp.float32),             # c carry
                pltpu.VMEM((slab, bB, 4 * Hp), jnp.float32),   # time-major gx
            ],
        ),
        compiler_params=pltpu.CompilerParams(
            dimension_semantics=("parallel", "arbitrary"),
            vmem_limit_bytes=vmem_limit,
        ),
    )(x, w_ih, w_hh, b, w1, b1, w2, b2)

    return out[:B, :C]


def init_params(key, embed_size, hidden_size, num_classes):
    """Deterministic init matching the PyTorch module's parameter shapes."""
    ks = jax.random.split(key, 8)
    H = hidden_size
    stdv = 1.0 / np.sqrt(H)
    u = lambda k, shape, s: jax.random.uniform(k, shape, jnp.float32, -s, s)
    return {
        # nn.LSTM(embed_size, hidden_size, 1): gate order [i, f, g, o]
        "w_ih": u(ks[0], (4 * H, embed_size), stdv),
        "w_hh": u(ks[1], (4 * H, H), stdv),
        "b_ih": u(ks[2], (4 * H,), stdv),
        "b_hh": u(ks[3], (4 * H,), stdv),
        # nn.Linear(hidden_size, 128)
        "w1": u(ks[4], (128, H), 1.0 / np.sqrt(H)),
        "b1": u(ks[5], (128,), 1.0 / np.sqrt(H)),
        # nn.Linear(128, num_classes)
        "w2": u(ks[6], (num_classes, 128), 1.0 / np.sqrt(128)),
        "b2": u(ks[7], (num_classes,), 1.0 / np.sqrt(128)),
    }


def reference_forward(features, params, matmul_dtype=jnp.float32):
    """Pure-JAX reference mirroring PyTorch nn.LSTM + classifier semantics."""
    B, T, E = features.shape
    H = params["w_hh"].shape[1]
    md = matmul_dtype
    w_ih = params["w_ih"].T.astype(md)
    w_hh = params["w_hh"].T.astype(md)
    b = (params["b_ih"] + params["b_hh"]).astype(jnp.float32)
    x_seq = jnp.transpose(features, (1, 0, 2)).astype(md)

    def step(carry, x_t):
        h, c = carry
        gates = (jnp.dot(x_t, w_ih, preferred_element_type=jnp.float32)
                 + jnp.dot(h.astype(md), w_hh, preferred_element_type=jnp.float32)
                 + b)
        i_g = jax.nn.sigmoid(gates[:, 0 * H:1 * H])
        f_g = jax.nn.sigmoid(gates[:, 1 * H:2 * H])
        g_g = jnp.tanh(gates[:, 2 * H:3 * H])
        o_g = jax.nn.sigmoid(gates[:, 3 * H:4 * H])
        c = f_g * c + i_g * g_g
        h = o_g * jnp.tanh(c)
        return (h, c), None

    h0 = jnp.zeros((B, H), jnp.float32)
    (h_last, _), _ = lax.scan(step, (h0, jnp.zeros_like(h0)), x_seq)
    z = jnp.maximum(
        jnp.dot(h_last.astype(md), params["w1"].T.astype(md),
                preferred_element_type=jnp.float32) + params["b1"], 0.0)
    return (jnp.dot(z.astype(md), params["w2"].T.astype(md),
                    preferred_element_type=jnp.float32) + params["b2"])


if __name__ == "__main__":
    key = jax.random.PRNGKey(0)
    k1x, k1p, k2x, k2p, k3x, k3p = jax.random.split(key, 6)

    # --- Test 1: small config (single slab, no batch split, no time padding).
    B, T, E, H, C = 2, 8, 32, 32, 4
    features = jax.random.normal(k1x, (B, T, E), jnp.float32)
    params = init_params(k1p, embed_size=E, hidden_size=H, num_classes=C)
    out = jax.block_until_ready(action_lstm_forward(features, params))
    assert out.shape == (B, C)
    ref_bf16 = reference_forward(features, params, matmul_dtype=jnp.bfloat16)
    np.testing.assert_allclose(np.asarray(out), np.asarray(ref_bf16),
                               rtol=5e-3, atol=5e-3)
    ref_f32 = reference_forward(features, params, matmul_dtype=jnp.float32)
    np.testing.assert_allclose(np.asarray(out), np.asarray(ref_f32),
                               rtol=1e-1, atol=1e-1)

    # --- Test 2: exercises the half-batch ILP split, multi-slab projection,
    # and the masked time-padding path (T=40 -> one 64-step chunk, 24 masked).
    B2, T2 = 16, 40
    features2 = jax.random.normal(k2x, (B2, T2, E), jnp.float32)
    params2 = init_params(k2p, embed_size=E, hidden_size=H, num_classes=C)
    out2 = jax.block_until_ready(action_lstm_forward(features2, params2))
    assert out2.shape == (B2, C)
    ref2 = reference_forward(features2, params2, matmul_dtype=jnp.bfloat16)
    np.testing.assert_allclose(np.asarray(out2), np.asarray(ref2),
                               rtol=1e-2, atol=1e-2)

    # --- Test 3: long sequence -> multiple time chunks (state carried across
    # grid iterations in VMEM scratch) plus masked remainder steps.
    B3, T3 = 8, 544
    features3 = jax.random.normal(k3x, (B3, T3, E), jnp.float32)
    params3 = init_params(k3p, embed_size=E, hidden_size=H, num_classes=C)
    out3 = jax.block_until_ready(action_lstm_forward(features3, params3))
    assert out3.shape == (B3, C)
    ref3 = reference_forward(features3, params3, matmul_dtype=jnp.bfloat16)
    np.testing.assert_allclose(np.asarray(out3), np.asarray(ref3),
                               rtol=2e-2, atol=2e-2)

    print("KERNEL_OK")
</pallas_src>

<mosaic_0001>
module attributes {stable_mosaic.version = 11 : i64} {
  func.func @kernel(%arg0: i32, %arg1: i32, %arg2: memref<8x8x128xbf16, #tpu.memory_space<vmem>>, %arg3: memref<128x512xbf16, #tpu.memory_space<vmem>>, %arg4: memref<128x512xbf16, #tpu.memory_space<vmem>>, %arg5: memref<1x512xf32, #tpu.memory_space<vmem>>, %arg6: memref<128x128xbf16, #tpu.memory_space<vmem>>, %arg7: memref<1x128xf32, #tpu.memory_space<vmem>>, %arg8: memref<128x128xbf16, #tpu.memory_space<vmem>>, %arg9: memref<1x128xf32, #tpu.memory_space<vmem>>, %arg10: memref<8x128xf32, #tpu.memory_space<vmem>>, %arg11: memref<8x128xbf16, #tpu.memory_space<vmem>>, %arg12: memref<8x128xf32, #tpu.memory_space<vmem>>, %arg13: memref<8x8x512xf32, #tpu.memory_space<vmem>>) attributes {dimension_semantics = [#tpu.dimension_semantics<parallel>, #tpu.dimension_semantics<arbitrary>], iteration_bounds = array<i64: 1, 1>, scalar_prefetch = 0 : i64, scratch_operands = 3 : i64, tpu.core_type = #tpu.core_type<tc>, window_params = [{transform_indices = @transform_0, window_bounds = array<i64: 8, 8, 128>}, {pipeline_mode = #tpu.pipeline_mode<synchronous>, transform_indices = @transform_1, window_bounds = array<i64: 128, 512>}, {pipeline_mode = #tpu.pipeline_mode<synchronous>, transform_indices = @transform_2, window_bounds = array<i64: 128, 512>}, {pipeline_mode = #tpu.pipeline_mode<synchronous>, transform_indices = @transform_3, window_bounds = array<i64: 1, 512>}, {pipeline_mode = #tpu.pipeline_mode<synchronous>, transform_indices = @transform_4, window_bounds = array<i64: 128, 128>}, {pipeline_mode = #tpu.pipeline_mode<synchronous>, transform_indices = @transform_5, window_bounds = array<i64: 1, 128>}, {pipeline_mode = #tpu.pipeline_mode<synchronous>, transform_indices = @transform_6, window_bounds = array<i64: 128, 128>}, {pipeline_mode = #tpu.pipeline_mode<synchronous>, transform_indices = @transform_7, window_bounds = array<i64: 1, 128>}, {transform_indices = @transform_8, window_bounds = array<i64: 8, 128>}]} {
    %c0_i32 = arith.constant 0 : i32
    %0 = arith.cmpi eq, %arg1, %c0_i32 : i32
    %1 = arith.extui %0 : i1 to i32
    %c0_i32_0 = arith.constant 0 : i32
    %2 = arith.cmpi ne, %1, %c0_i32_0 : i32
    scf.if %2 {
      %cst_73 = arith.constant 0.000000e+00 : bf16
      %271 = vector.broadcast %cst_73 : bf16 to vector<8x128xbf16>
      %c0_74 = arith.constant 0 : index
      %c0_75 = arith.constant 0 : index
      %272 = vector.load %arg11[%c0_74, %c0_75] : memref<8x128xbf16, #tpu.memory_space<vmem>>, vector<8x128xbf16>
      tpu.vector_store %arg11[%c0_74, %c0_75], %271 {strides = array<i32>} : memref<8x128xbf16, #tpu.memory_space<vmem>>, vector<8x128xbf16>,
      %cst_76 = arith.constant 0.000000e+00 : f32
      %273 = vector.broadcast %cst_76 : f32 to vector<8x128xf32>
      %c0_77 = arith.constant 0 : index
      %c0_78 = arith.constant 0 : index
      %274 = vector.load %arg12[%c0_77, %c0_78] : memref<8x128xf32, #tpu.memory_space<vmem>>, vector<8x128xf32>
      tpu.vector_store %arg12[%c0_77, %c0_78], %273 {strides = array<i32>} : memref<8x128xf32, #tpu.memory_space<vmem>>, vector<8x128xf32>,
    } else {
    }
    %c0 = arith.constant 0 : index
    %c0_1 = arith.constant 0 : index
    %3 = vector.load %arg4[%c0, %c0_1] : memref<128x512xbf16, #tpu.memory_space<vmem>>, vector<128x512xbf16>
    %c0_2 = arith.constant 0 : index
    %c0_3 = arith.constant 0 : index
    %4 = vector.load %arg5[%c0_2, %c0_3] : memref<1x512xf32, #tpu.memory_space<vmem>>, vector<1x512xf32>
    %c0_4 = arith.constant 0 : index
    %c0_5 = arith.constant 0 : index
    %5 = vector.load %arg11[%c0_4, %c0_5] : memref<8x128xbf16, #tpu.memory_space<vmem>>, vector<8x128xbf16>
    %c0_6 = arith.constant 0 : index
    %c0_7 = arith.constant 0 : index
    %6 = vector.load %arg12[%c0_6, %c0_7] : memref<8x128xf32, #tpu.memory_space<vmem>>, vector<8x128xf32>
    %c0_i32_8 = arith.constant 0 : i32
    %c8_i32 = arith.constant 8 : i32
    %7 = arith.muli %c0_i32_8, %c8_i32 : i32
    %8 = tpu.assume_multiple %7, 8 : i32
    %9 = arith.index_cast %8 : i32 to index
    %c0_9 = arith.constant 0 : index
    %c0_10 = arith.constant 0 : index
    %10 = vector.load %arg2[%9, %c0_9, %c0_10] : memref<8x8x128xbf16, #tpu.memory_space<vmem>>, vector<8x8x128xbf16>
    %11 = vector.shape_cast %10 : vector<8x8x128xbf16> to vector<64x128xbf16>
    %c0_11 = arith.constant 0 : index
    %c0_12 = arith.constant 0 : index
    %12 = vector.load %arg3[%c0_11, %c0_12] : memref<128x512xbf16, #tpu.memory_space<vmem>>, vector<128x512xbf16>
    %cst = arith.constant dense<0.000000e+00> : vector<64x512xf32>
    %13 = tpu.matmul %11, %12, %cst {dimension_numbers = #tpu.dot_dimension_numbers<[1], [0], [0], [1], [0, 0, 1, 1], [], []>} : vector<64x128xbf16>, vector<128x512xbf16>, vector<64x512xf32> -> vector<64x512xf32>
    %14 = vector.broadcast %4 : vector<1x512xf32> to vector<64x512xf32>
    %15 = arith.addf %13, %14 : vector<64x512xf32>
    %16 = vector.shape_cast %15 : vector<64x512xf32> to vector<8x8x512xf32>
    %c0_13 = arith.constant 0 : index
    %c0_14 = arith.constant 0 : index
    %c0_15 = arith.constant 0 : index
    %17 = vector.load %arg13[%c0_13, %c0_14, %c0_15] : memref<8x8x512xf32, #tpu.memory_space<vmem>>, vector<8x8x512xf32>
    tpu.vector_store %arg13[%c0_13, %c0_14, %c0_15], %16 {strides = array<i32>} : memref<8x8x512xf32, #tpu.memory_space<vmem>>, vector<8x8x512xf32>,
    %c0_i32_16 = arith.constant 0 : i32
    %18 = arith.index_cast %c0_i32_16 : i32 to index
    %c0_17 = arith.constant 0 : index
    %c0_18 = arith.constant 0 : index
    %19 = vector.load %arg13[%18, %c0_17, %c0_18] : memref<8x8x512xf32, #tpu.memory_space<vmem>>, vector<1x8x512xf32>
    %20 = vector.shape_cast %19 : vector<1x8x512xf32> to vector<8x512xf32>
    %cst_19 = arith.constant dense<0.000000e+00> : vector<8x512xf32>
    %21 = tpu.matmul %5, %3, %cst_19 {dimension_numbers = #tpu.dot_dimension_numbers<[1], [0], [0], [1], [0, 0, 1, 1], [], []>} : vector<8x128xbf16>, vector<128x512xbf16>, vector<8x512xf32> -> vector<8x512xf32>
    %22 = arith.addf %20, %21 : vector<8x512xf32>
    %23 = vector.extract_strided_slice %22 {offsets = [0, 0], sizes = [8, 128], strides = [1, 1]} : vector<8x512xf32> to vector<8x128xf32>
    %24 = arith.negf %23 : vector<8x128xf32>
    %25 = math.exp %24 : vector<8x128xf32>
    %cst_20 = arith.constant 1.000000e+00 : f32
    %26 = vector.broadcast %cst_20 : f32 to vector<8x128xf32>
    %27 = arith.addf %26, %25 : vector<8x128xf32>
    %28 = arith.divf %26, %27 : vector<8x128xf32>
    %29 = vector.extract_strided_slice %22 {offsets = [0, 128], sizes = [8, 128], strides = [1, 1]} : vector<8x512xf32> to vector<8x128xf32>
    %30 = arith.negf %29 : vector<8x128xf32>
    %31 = math.exp %30 : vector<8x128xf32>
    %cst_21 = arith.constant 1.000000e+00 : f32
    %32 = vector.broadcast %cst_21 : f32 to vector<8x128xf32>
    %33 = arith.addf %32, %31 : vector<8x128xf32>
    %34 = arith.divf %32, %33 : vector<8x128xf32>
    %35 = vector.extract_strided_slice %22 {offsets = [0, 256], sizes = [8, 128], strides = [1, 1]} : vector<8x512xf32> to vector<8x128xf32>
    %36 = math.tanh %35 : vector<8x128xf32>
    %37 = vector.extract_strided_slice %22 {offsets = [0, 384], sizes = [8, 128], strides = [1, 1]} : vector<8x512xf32> to vector<8x128xf32>
    %38 = arith.negf %37 : vector<8x128xf32>
    %39 = math.exp %38 : vector<8x128xf32>
    %cst_22 = arith.constant 1.000000e+00 : f32
    %40 = vector.broadcast %cst_22 : f32 to vector<8x128xf32>
    %41 = arith.addf %40, %39 : vector<8x128xf32>
    %42 = arith.divf %40, %41 : vector<8x128xf32>
    %43 = arith.mulf %34, %6 : vector<8x128xf32>
    %44 = arith.mulf %28, %36 : vector<8x128xf32>
    %45 = arith.addf %43, %44 : vector<8x128xf32>
    %46 = math.tanh %45 : vector<8x128xf32>
    %47 = arith.mulf %42, %46 : vector<8x128xf32>
    %48 = arith.truncf %47 : vector<8x128xf32> to vector<8x128xbf16>
    %c1_i32 = arith.constant 1 : i32
    %49 = arith.index_cast %c1_i32 : i32 to index
    %c0_23 = arith.constant 0 : index
    %c0_24 = arith.constant 0 : index
    %50 = vector.load %arg13[%49, %c0_23, %c0_24] : memref<8x8x512xf32, #tpu.memory_space<vmem>>, vector<1x8x512xf32>
    %51 = vector.shape_cast %50 : vector<1x8x512xf32> to vector<8x512xf32>
    %cst_25 = arith.constant dense<0.000000e+00> : vector<8x512xf32>
    %52 = tpu.matmul %48, %3, %cst_25 {dimension_numbers = #tpu.dot_dimension_numbers<[1], [0], [0], [1], [0, 0, 1, 1], [], []>} : vector<8x128xbf16>, vector<128x512xbf16>, vector<8x512xf32> -> vector<8x512xf32>
    %53 = arith.addf %51, %52 : vector<8x512xf32>
    %54 = vector.extract_strided_slice %53 {offsets = [0, 0], sizes = [8, 128], strides = [1, 1]} : vector<8x512xf32> to vector<8x128xf32>
    %55 = arith.negf %54 : vector<8x128xf32>
    %56 = math.exp %55 : vector<8x128xf32>
    %cst_26 = arith.constant 1.000000e+00 : f32
    %57 = vector.broadcast %cst_26 : f32 to vector<8x128xf32>
    %58 = arith.addf %57, %56 : vector<8x128xf32>
    %59 = arith.divf %57, %58 : vector<8x128xf32>
    %60 = vector.extract_strided_slice %53 {offsets = [0, 128], sizes = [8, 128], strides = [1, 1]} : vector<8x512xf32> to vector<8x128xf32>
    %61 = arith.negf %60 : vector<8x128xf32>
    %62 = math.exp %61 : vector<8x128xf32>
    %cst_27 = arith.constant 1.000000e+00 : f32
    %63 = vector.broadcast %cst_27 : f32 to vector<8x128xf32>
    %64 = arith.addf %63, %62 : vector<8x128xf32>
    %65 = arith.divf %63, %64 : vector<8x128xf32>
    %66 = vector.extract_strided_slice %53 {offsets = [0, 256], sizes = [8, 128], strides = [1, 1]} : vector<8x512xf32> to vector<8x128xf32>
    %67 = math.tanh %66 : vector<8x128xf32>
    %68 = vector.extract_strided_slice %53 {offsets = [0, 384], sizes = [8, 128], strides = [1, 1]} : vector<8x512xf32> to vector<8x128xf32>
    %69 = arith.negf %68 : vector<8x128xf32>
    %70 = math.exp %69 : vector<8x128xf32>
    %cst_28 = arith.constant 1.000000e+00 : f32
    %71 = vector.broadcast %cst_28 : f32 to vector<8x128xf32>
    %72 = arith.addf %71, %70 : vector<8x128xf32>
    %73 = arith.divf %71, %72 : vector<8x128xf32>
    %74 = arith.mulf %65, %45 : vector<8x128xf32>
    %75 = arith.mulf %59, %67 : vector<8x128xf32>
    %76 = arith.addf %74, %75 : vector<8x128xf32>
    %77 = math.tanh %76 : vector<8x128xf32>
    %78 = arith.mulf %73, %77 : vector<8x128xf32>
    %79 = arith.truncf %78 : vector<8x128xf32> to vector<8x128xbf16>
    %c2_i32 = arith.constant 2 : i32
    %80 = arith.index_cast %c2_i32 : i32 to index
    %c0_29 = arith.constant 0 : index
    %c0_30 = arith.constant 0 : index
    %81 = vector.load %arg13[%80, %c0_29, %c0_30] : memref<8x8x512xf32, #tpu.memory_space<vmem>>, vector<1x8x512xf32>
    %82 = vector.shape_cast %81 : vector<1x8x512xf32> to vector<8x512xf32>
    %cst_31 = arith.constant dense<0.000000e+00> : vector<8x512xf32>
    %83 = tpu.matmul %79, %3, %cst_31 {dimension_numbers = #tpu.dot_dimension_numbers<[1], [0], [0], [1], [0, 0, 1, 1], [], []>} : vector<8x128xbf16>, vector<128x512xbf16>, vector<8x512xf32> -> vector<8x512xf32>
    %84 = arith.addf %82, %83 : vector<8x512xf32>
    %85 = vector.extract_strided_slice %84 {offsets = [0, 0], sizes = [8, 128], strides = [1, 1]} : vector<8x512xf32> to vector<8x128xf32>
    %86 = arith.negf %85 : vector<8x128xf32>
    %87 = math.exp %86 : vector<8x128xf32>
    %cst_32 = arith.constant 1.000000e+00 : f32
    %88 = vector.broadcast %cst_32 : f32 to vector<8x128xf32>
    %89 = arith.addf %88, %87 : vector<8x128xf32>
    %90 = arith.divf %88, %89 : vector<8x128xf32>
    %91 = vector.extract_strided_slice %84 {offsets = [0, 128], sizes = [8, 128], strides = [1, 1]} : vector<8x512xf32> to vector<8x128xf32>
    %92 = arith.negf %91 : vector<8x128xf32>
    %93 = math.exp %92 : vector<8x128xf32>
    %cst_33 = arith.constant 1.000000e+00 : f32
    %94 = vector.broadcast %cst_33 : f32 to vector<8x128xf32>
    %95 = arith.addf %94, %93 : vector<8x128xf32>
    %96 = arith.divf %94, %95 : vector<8x128xf32>
    %97 = vector.extract_strided_slice %84 {offsets = [0, 256], sizes = [8, 128], strides = [1, 1]} : vector<8x512xf32> to vector<8x128xf32>
    %98 = math.tanh %97 : vector<8x128xf32>
    %99 = vector.extract_strided_slice %84 {offsets = [0, 384], sizes = [8, 128], strides = [1, 1]} : vector<8x512xf32> to vector<8x128xf32>
    %100 = arith.negf %99 : vector<8x128xf32>
    %101 = math.exp %100 : vector<8x128xf32>
    %cst_34 = arith.constant 1.000000e+00 : f32
    %102 = vector.broadcast %cst_34 : f32 to vector<8x128xf32>
    %103 = arith.addf %102, %101 : vector<8x128xf32>
    %104 = arith.divf %102, %103 : vector<8x128xf32>
    %105 = arith.mulf %96, %76 : vector<8x128xf32>
    %106 = arith.mulf %90, %98 : vector<8x128xf32>
    %107 = arith.addf %105, %106 : vector<8x128xf32>
    %108 = math.tanh %107 : vector<8x128xf32>
    %109 = arith.mulf %104, %108 : vector<8x128xf32>
    %110 = arith.truncf %109 : vector<8x128xf32> to vector<8x128xbf16>
    %c3_i32 = arith.constant 3 : i32
    %111 = arith.index_cast %c3_i32 : i32 to index
    %c0_35 = arith.constant 0 : index
    %c0_36 = arith.constant 0 : index
    %112 = vector.load %arg13[%111, %c0_35, %c0_36] : memref<8x8x512xf32, #tpu.memory_space<vmem>>, vector<1x8x512xf32>
    %113 = vector.shape_cast %112 : vector<1x8x512xf32> to vector<8x512xf32>
    %cst_37 = arith.constant dense<0.000000e+00> : vector<8x512xf32>
    %114 = tpu.matmul %110, %3, %cst_37 {dimension_numbers = #tpu.dot_dimension_numbers<[1], [0], [0], [1], [0, 0, 1, 1], [], []>} : vector<8x128xbf16>, vector<128x512xbf16>, vector<8x512xf32> -> vector<8x512xf32>
    %115 = arith.addf %113, %114 : vector<8x512xf32>
    %116 = vector.extract_strided_slice %115 {offsets = [0, 0], sizes = [8, 128], strides = [1, 1]} : vector<8x512xf32> to vector<8x128xf32>
    %117 = arith.negf %116 : vector<8x128xf32>
    %118 = math.exp %117 : vector<8x128xf32>
    %cst_38 = arith.constant 1.000000e+00 : f32
    %119 = vector.broadcast %cst_38 : f32 to vector<8x128xf32>
    %120 = arith.addf %119, %118 : vector<8x128xf32>
    %121 = arith.divf %119, %120 : vector<8x128xf32>
    %122 = vector.extract_strided_slice %115 {offsets = [0, 128], sizes = [8, 128], strides = [1, 1]} : vector<8x512xf32> to vector<8x128xf32>
    %123 = arith.negf %122 : vector<8x128xf32>
    %124 = math.exp %123 : vector<8x128xf32>
    %cst_39 = arith.constant 1.000000e+00 : f32
    %125 = vector.broadcast %cst_39 : f32 to vector<8x128xf32>
    %126 = arith.addf %125, %124 : vector<8x128xf32>
    %127 = arith.divf %125, %126 : vector<8x128xf32>
    %128 = vector.extract_strided_slice %115 {offsets = [0, 256], sizes = [8, 128], strides = [1, 1]} : vector<8x512xf32> to vector<8x128xf32>
    %129 = math.tanh %128 : vector<8x128xf32>
    %130 = vector.extract_strided_slice %115 {offsets = [0, 384], sizes = [8, 128], strides = [1, 1]} : vector<8x512xf32> to vector<8x128xf32>
    %131 = arith.negf %130 : vector<8x128xf32>
    %132 = math.exp %131 : vector<8x128xf32>
    %cst_40 = arith.constant 1.000000e+00 : f32
    %133 = vector.broadcast %cst_40 : f32 to vector<8x128xf32>
    %134 = arith.addf %133, %132 : vector<8x128xf32>
    %135 = arith.divf %133, %134 : vector<8x128xf32>
    %136 = arith.mulf %127, %107 : vector<8x128xf32>
    %137 = arith.mulf %121, %129 : vector<8x128xf32>
    %138 = arith.addf %136, %137 : vector<8x128xf32>
    %139 = math.tanh %138 : vector<8x128xf32>
    %140 = arith.mulf %135, %139 : vector<8x128xf32>
    %141 = arith.truncf %140 : vector<8x128xf32> to vector<8x128xbf16>
    %c4_i32 = arith.constant 4 : i32
    %142 = arith.index_cast %c4_i32 : i32 to index
    %c0_41 = arith.constant 0 : index
    %c0_42 = arith.constant 0 : index
    %143 = vector.load %arg13[%142, %c0_41, %c0_42] : memref<8x8x512xf32, #tpu.memory_space<vmem>>, vector<1x8x512xf32>
    %144 = vector.shape_cast %143 : vector<1x8x512xf32> to vector<8x512xf32>
    %cst_43 = arith.constant dense<0.000000e+00> : vector<8x512xf32>
    %145 = tpu.matmul %141, %3, %cst_43 {dimension_numbers = #tpu.dot_dimension_numbers<[1], [0], [0], [1], [0, 0, 1, 1], [], []>} : vector<8x128xbf16>, vector<128x512xbf16>, vector<8x512xf32> -> vector<8x512xf32>
    %146 = arith.addf %144, %145 : vector<8x512xf32>
    %147 = vector.extract_strided_slice %146 {offsets = [0, 0], sizes = [8, 128], strides = [1, 1]} : vector<8x512xf32> to vector<8x128xf32>
    %148 = arith.negf %147 : vector<8x128xf32>
    %149 = math.exp %148 : vector<8x128xf32>
    %cst_44 = arith.constant 1.000000e+00 : f32
    %150 = vector.broadcast %cst_44 : f32 to vector<8x128xf32>
    %151 = arith.addf %150, %149 : vector<8x128xf32>
    %152 = arith.divf %150, %151 : vector<8x128xf32>
    %153 = vector.extract_strided_slice %146 {offsets = [0, 128], sizes = [8, 128], strides = [1, 1]} : vector<8x512xf32> to vector<8x128xf32>
    %154 = arith.negf %153 : vector<8x128xf32>
    %155 = math.exp %154 : vector<8x128xf32>
    %cst_45 = arith.constant 1.000000e+00 : f32
    %156 = vector.broadcast %cst_45 : f32 to vector<8x128xf32>
    %157 = arith.addf %156, %155 : vector<8x128xf32>
    %158 = arith.divf %156, %157 : vector<8x128xf32>
    %159 = vector.extract_strided_slice %146 {offsets = [0, 256], sizes = [8, 128], strides = [1, 1]} : vector<8x512xf32> to vector<8x128xf32>
    %160 = math.tanh %159 : vector<8x128xf32>
    %161 = vector.extract_strided_slice %146 {offsets = [0, 384], sizes = [8, 128], strides = [1, 1]} : vector<8x512xf32> to vector<8x128xf32>
    %162 = arith.negf %161 : vector<8x128xf32>
    %163 = math.exp %162 : vector<8x128xf32>
    %cst_46 = arith.constant 1.000000e+00 : f32
    %164 = vector.broadcast %cst_46 : f32 to vector<8x128xf32>
    %165 = arith.addf %164, %163 : vector<8x128xf32>
    %166 = arith.divf %164, %165 : vector<8x128xf32>
    %167 = arith.mulf %158, %138 : vector<8x128xf32>
    %168 = arith.mulf %152, %160 : vector<8x128xf32>
    %169 = arith.addf %167, %168 : vector<8x128xf32>
    %170 = math.tanh %169 : vector<8x128xf32>
    %171 = arith.mulf %166, %170 : vector<8x128xf32>
    %172 = arith.truncf %171 : vector<8x128xf32> to vector<8x128xbf16>
    %c5_i32 = arith.constant 5 : i32
    %173 = arith.index_cast %c5_i32 : i32 to index
    %c0_47 = arith.constant 0 : index
    %c0_48 = arith.constant 0 : index
    %174 = vector.load %arg13[%173, %c0_47, %c0_48] : memref<8x8x512xf32, #tpu.memory_space<vmem>>, vector<1x8x512xf32>
    %175 = vector.shape_cast %174 : vector<1x8x512xf32> to vector<8x512xf32>
    %cst_49 = arith.constant dense<0.000000e+00> : vector<8x512xf32>
    %176 = tpu.matmul %172, %3, %cst_49 {dimension_numbers = #tpu.dot_dimension_numbers<[1], [0], [0], [1], [0, 0, 1, 1], [], []>} : vector<8x128xbf16>, vector<128x512xbf16>, vector<8x512xf32> -> vector<8x512xf32>
    %177 = arith.addf %175, %176 : vector<8x512xf32>
    %178 = vector.extract_strided_slice %177 {offsets = [0, 0], sizes = [8, 128], strides = [1, 1]} : vector<8x512xf32> to vector<8x128xf32>
    %179 = arith.negf %178 : vector<8x128xf32>
    %180 = math.exp %179 : vector<8x128xf32>
    %cst_50 = arith.constant 1.000000e+00 : f32
    %181 = vector.broadcast %cst_50 : f32 to vector<8x128xf32>
    %182 = arith.addf %181, %180 : vector<8x128xf32>
    %183 = arith.divf %181, %182 : vector<8x128xf32>
    %184 = vector.extract_strided_slice %177 {offsets = [0, 128], sizes = [8, 128], strides = [1, 1]} : vector<8x512xf32> to vector<8x128xf32>
    %185 = arith.negf %184 : vector<8x128xf32>
    %186 = math.exp %185 : vector<8x128xf32>
    %cst_51 = arith.constant 1.000000e+00 : f32
    %187 = vector.broadcast %cst_51 : f32 to vector<8x128xf32>
    %188 = arith.addf %187, %186 : vector<8x128xf32>
    %189 = arith.divf %187, %188 : vector<8x128xf32>
    %190 = vector.extract_strided_slice %177 {offsets = [0, 256], sizes = [8, 128], strides = [1, 1]} : vector<8x512xf32> to vector<8x128xf32>
    %191 = math.tanh %190 : vector<8x128xf32>
    %192 = vector.extract_strided_slice %177 {offsets = [0, 384], sizes = [8, 128], strides = [1, 1]} : vector<8x512xf32> to vector<8x128xf32>
    %193 = arith.negf %192 : vector<8x128xf32>
    %194 = math.exp %193 : vector<8x128xf32>
    %cst_52 = arith.constant 1.000000e+00 : f32
    %195 = vector.broadcast %cst_52 : f32 to vector<8x128xf32>
    %196 = arith.addf %195, %194 : vector<8x128xf32>
    %197 = arith.divf %195, %196 : vector<8x128xf32>
    %198 = arith.mulf %189, %169 : vector<8x128xf32>
    %199 = arith.mulf %183, %191 : vector<8x128xf32>
    %200 = arith.addf %198, %199 : vector<8x128xf32>
    %201 = math.tanh %200 : vector<8x128xf32>
    %202 = arith.mulf %197, %201 : vector<8x128xf32>
    %203 = arith.truncf %202 : vector<8x128xf32> to vector<8x128xbf16>
    %c6_i32 = arith.constant 6 : i32
    %204 = arith.index_cast %c6_i32 : i32 to index
    %c0_53 = arith.constant 0 : index
    %c0_54 = arith.constant 0 : index
    %205 = vector.load %arg13[%204, %c0_53, %c0_54] : memref<8x8x512xf32, #tpu.memory_space<vmem>>, vector<1x8x512xf32>
    %206 = vector.shape_cast %205 : vector<1x8x512xf32> to vector<8x512xf32>
    %cst_55 = arith.constant dense<0.000000e+00> : vector<8x512xf32>
    %207 = tpu.matmul %203, %3, %cst_55 {dimension_numbers = #tpu.dot_dimension_numbers<[1], [0], [0], [1], [0, 0, 1, 1], [], []>} : vector<8x128xbf16>, vector<128x512xbf16>, vector<8x512xf32> -> vector<8x512xf32>
    %208 = arith.addf %206, %207 : vector<8x512xf32>
    %209 = vector.extract_strided_slice %208 {offsets = [0, 0], sizes = [8, 128], strides = [1, 1]} : vector<8x512xf32> to vector<8x128xf32>
    %210 = arith.negf %209 : vector<8x128xf32>
    %211 = math.exp %210 : vector<8x128xf32>
    %cst_56 = arith.constant 1.000000e+00 : f32
    %212 = vector.broadcast %cst_56 : f32 to vector<8x128xf32>
    %213 = arith.addf %212, %211 : vector<8x128xf32>
    %214 = arith.divf %212, %213 : vector<8x128xf32>
    %215 = vector.extract_strided_slice %208 {offsets = [0, 128], sizes = [8, 128], strides = [1, 1]} : vector<8x512xf32> to vector<8x128xf32>
    %216 = arith.negf %215 : vector<8x128xf32>
    %217 = math.exp %216 : vector<8x128xf32>
    %cst_57 = arith.constant 1.000000e+00 : f32
    %218 = vector.broadcast %cst_57 : f32 to vector<8x128xf32>
    %219 = arith.addf %218, %217 : vector<8x128xf32>
    %220 = arith.divf %218, %219 : vector<8x128xf32>
    %221 = vector.extract_strided_slice %208 {offsets = [0, 256], sizes = [8, 128], strides = [1, 1]} : vector<8x512xf32> to vector<8x128xf32>
    %222 = math.tanh %221 : vector<8x128xf32>
    %223 = vector.extract_strided_slice %208 {offsets = [0, 384], sizes = [8, 128], strides = [1, 1]} : vector<8x512xf32> to vector<8x128xf32>
    %224 = arith.negf %223 : vector<8x128xf32>
    %225 = math.exp %224 : vector<8x128xf32>
    %cst_58 = arith.constant 1.000000e+00 : f32
    %226 = vector.broadcast %cst_58 : f32 to vector<8x128xf32>
    %227 = arith.addf %226, %225 : vector<8x128xf32>
    %228 = arith.divf %226, %227 : vector<8x128xf32>
    %229 = arith.mulf %220, %200 : vector<8x128xf32>
    %230 = arith.mulf %214, %222 : vector<8x128xf32>
    %231 = arith.addf %229, %230 : vector<8x128xf32>
    %232 = math.tanh %231 : vector<8x128xf32>
    %233 = arith.mulf %228, %232 : vector<8x128xf32>
    %234 = arith.truncf %233 : vector<8x128xf32> to vector<8x128xbf16>
    %c7_i32 = arith.constant 7 : i32
    %235 = arith.index_cast %c7_i32 : i32 to index
    %c0_59 = arith.constant 0 : index
    %c0_60 = arith.constant 0 : index
    %236 = vector.load %arg13[%235, %c0_59, %c0_60] : memref<8x8x512xf32, #tpu.memory_space<vmem>>, vector<1x8x512xf32>
    %237 = vector.shape_cast %236 : vector<1x8x512xf32> to vector<8x512xf32>
    %cst_61 = arith.constant dense<0.000000e+00> : vector<8x512xf32>
    %238 = tpu.matmul %234, %3, %cst_61 {dimension_numbers = #tpu.dot_dimension_numbers<[1], [0], [0], [1], [0, 0, 1, 1], [], []>} : vector<8x128xbf16>, vector<128x512xbf16>, vector<8x512xf32> -> vector<8x512xf32>
    %239 = arith.addf %237, %238 : vector<8x512xf32>
    %240 = vector.extract_strided_slice %239 {offsets = [0, 0], sizes = [8, 128], strides = [1, 1]} : vector<8x512xf32> to vector<8x128xf32>
    %241 = arith.negf %240 : vector<8x128xf32>
    %242 = math.exp %241 : vector<8x128xf32>
    %cst_62 = arith.constant 1.000000e+00 : f32
    %243 = vector.broadcast %cst_62 : f32 to vector<8x128xf32>
    %244 = arith.addf %243, %242 : vector<8x128xf32>
    %245 = arith.divf %243, %244 : vector<8x128xf32>
    %246 = vector.extract_strided_slice %239 {offsets = [0, 128], sizes = [8, 128], strides = [1, 1]} : vector<8x512xf32> to vector<8x128xf32>
    %247 = arith.negf %246 : vector<8x128xf32>
    %248 = math.exp %247 : vector<8x128xf32>
    %cst_63 = arith.constant 1.000000e+00 : f32
    %249 = vector.broadcast %cst_63 : f32 to vector<8x128xf32>
    %250 = arith.addf %249, %248 : vector<8x128xf32>
    %251 = arith.divf %249, %250 : vector<8x128xf32>
    %252 = vector.extract_strided_slice %239 {offsets = [0, 256], sizes = [8, 128], strides = [1, 1]} : vector<8x512xf32> to vector<8x128xf32>
    %253 = math.tanh %252 : vector<8x128xf32>
    %254 = vector.extract_strided_slice %239 {offsets = [0, 384], sizes = [8, 128], strides = [1, 1]} : vector<8x512xf32> to vector<8x128xf32>
    %255 = arith.negf %254 : vector<8x128xf32>
    %256 = math.exp %255 : vector<8x128xf32>
    %cst_64 = arith.constant 1.000000e+00 : f32
    %257 = vector.broadcast %cst_64 : f32 to vector<8x128xf32>
    %258 = arith.addf %257, %256 : vector<8x128xf32>
    %259 = arith.divf %257, %258 : vector<8x128xf32>
    %260 = arith.mulf %251, %231 : vector<8x128xf32>
    %261 = arith.mulf %245, %253 : vector<8x128xf32>
    %262 = arith.addf %260, %261 : vector<8x128xf32>
    %263 = math.tanh %262 : vector<8x128xf32>
    %264 = arith.mulf %259, %263 : vector<8x128xf32>
    %265 = arith.truncf %264 : vector<8x128xf32> to vector<8x128xbf16>
    %c8_i32_65 = arith.constant 8 : i32
    %c1_i32_66 = arith.constant 1 : i32
    %c0_67 = arith.constant 0 : index
    %c0_68 = arith.constant 0 : index
    %266 = vector.load %arg11[%c0_67, %c0_68] : memref<8x128xbf16, #tpu.memory_space<vmem>>, vector<8x128xbf16>
    tpu.vector_store %arg11[%c0_67, %c0_68], %265 {strides = array<i32>} : memref<8x128xbf16, #tpu.memory_space<vmem>>, vector<8x128xbf16>,
    %c0_69 = arith.constant 0 : index
    %c0_70 = arith.constant 0 : index
    %267 = vector.load %arg12[%c0_69, %c0_70] : memref<8x128xf32, #tpu.memory_space<vmem>>, vector<8x128xf32>
    tpu.vector_store %arg12[%c0_69, %c0_70], %262 {strides = array<i32>} : memref<8x128xf32, #tpu.memory_space<vmem>>, vector<8x128xf32>,
    %c0_i32_71 = arith.constant 0 : i32
    %268 = arith.cmpi eq, %arg1, %c0_i32_71 : i32
    %269 = arith.extui %268 : i1 to i32
    %c0_i32_72 = arith.constant 0 : i32
    %270 = arith.cmpi ne, %269, %c0_i32_72 : i32
    scf.if %270 {
      %c0_73 = arith.constant 0 : index
      %c0_74 = arith.constant 0 : index
      %271 = vector.load %arg11[%c0_73, %c0_74] : memref<8x128xbf16, #tpu.memory_space<vmem>>, vector<8x128xbf16>
      %c0_75 = arith.constant 0 : index
      %c0_76 = arith.constant 0 : index
      %272 = vector.load %arg6[%c0_75, %c0_76] : memref<128x128xbf16, #tpu.memory_space<vmem>>, vector<128x128xbf16>
      %cst_77 = arith.constant dense<0.000000e+00> : vector<8x128xf32>
      %273 = tpu.matmul %271, %272, %cst_77 {dimension_numbers = #tpu.dot_dimension_numbers<[1], [0], [0], [1], [0, 0, 1, 1], [], []>} : vector<8x128xbf16>, vector<128x128xbf16>, vector<8x128xf32> -> vector<8x128xf32>
      %c0_78 = arith.constant 0 : index
      %c0_79 = arith.constant 0 : index
      %274 = vector.load %arg7[%c0_78, %c0_79] : memref<1x128xf32, #tpu.memory_space<vmem>>, vector<1x128xf32>
      %275 = vector.broadcast %274 : vector<1x128xf32> to vector<8x128xf32>
      %276 = arith.addf %273, %275 : vector<8x128xf32>
      %cst_80 = arith.constant 0.000000e+00 : f32
      %277 = vector.broadcast %cst_80 : f32 to vector<8x128xf32>
      %278 = arith.maximumf %276, %277 : vector<8x128xf32>
      %279 = arith.truncf %278 : vector<8x128xf32> to vector<8x128xbf16>
      %c0_81 = arith.constant 0 : index
      %c0_82 = arith.constant 0 : index
      %280 = vector.load %arg8[%c0_81, %c0_82] : memref<128x128xbf16, #tpu.memory_space<vmem>>, vector<128x128xbf16>
      %cst_83 = arith.constant dense<0.000000e+00> : vector<8x128xf32>
      %281 = tpu.matmul %279, %280, %cst_83 {dimension_numbers = #tpu.dot_dimension_numbers<[1], [0], [0], [1], [0, 0, 1, 1], [], []>} : vector<8x128xbf16>, vector<128x128xbf16>, vector<8x128xf32> -> vector<8x128xf32>
      %c0_84 = arith.constant 0 : index
      %c0_85 = arith.constant 0 : index
      %282 = vector.load %arg9[%c0_84, %c0_85] : memref<1x128xf32, #tpu.memory_space<vmem>>, vector<1x128xf32>
      %283 = vector.broadcast %282 : vector<1x128xf32> to vector<8x128xf32>
      %284 = arith.addf %281, %283 : vector<8x128xf32>
      %c0_86 = arith.constant 0 : index
      %c0_87 = arith.constant 0 : index
      %285 = vector.load %arg10[%c0_86, %c0_87] : memref<8x128xf32, #tpu.memory_space<vmem>>, vector<8x128xf32>
      tpu.vector_store %arg10[%c0_86, %c0_87], %284 {strides = array<i32>} : memref<8x128xf32, #tpu.memory_space<vmem>>, vector<8x128xf32>,
    } else {
    }
    return
  }
  func.func @transform_0(%arg0: i32, %arg1: i32) -> (i32, i32, i32) {
    %c0_i32 = arith.constant 0 : i32
    %c0_i32_0 = arith.constant 0 : i32
    return %arg1, %arg0, %c0_i32 : i32, i32, i32
  }
  func.func @transform_1(%arg0: i32, %arg1: i32) -> (i32, i32) {
    %c0_i32 = arith.constant 0 : i32
    %c0_i32_0 = arith.constant 0 : i32
    %c0_i32_1 = arith.constant 0 : i32
    return %c0_i32, %c0_i32_0 : i32, i32
  }
  func.func @transform_2(%arg0: i32, %arg1: i32) -> (i32, i32) {
    %c0_i32 = arith.constant 0 : i32
    %c0_i32_0 = arith.constant 0 : i32
    %c0_i32_1 = arith.constant 0 : i32
    return %c0_i32, %c0_i32_0 : i32, i32
  }
  func.func @transform_3(%arg0: i32, %arg1: i32) -> (i32, i32) {
    %c0_i32 = arith.constant 0 : i32
    %c0_i32_0 = arith.constant 0 : i32
    %c0_i32_1 = arith.constant 0 : i32
    return %c0_i32, %c0_i32_0 : i32, i32
  }
  func.func @transform_4(%arg0: i32, %arg1: i32) -> (i32, i32) {
    %c0_i32 = arith.constant 0 : i32
    %c0_i32_0 = arith.constant 0 : i32
    %c0_i32_1 = arith.constant 0 : i32
    return %c0_i32, %c0_i32_0 : i32, i32
  }
  func.func @transform_5(%arg0: i32, %arg1: i32) -> (i32, i32) {
    %c0_i32 = arith.constant 0 : i32
    %c0_i32_0 = arith.constant 0 : i32
    %c0_i32_1 = arith.constant 0 : i32
    return %c0_i32, %c0_i32_0 : i32, i32
  }
  func.func @transform_6(%arg0: i32, %arg1: i32) -> (i32, i32) {
    %c0_i32 = arith.constant 0 : i32
    %c0_i32_0 = arith.constant 0 : i32
    %c0_i32_1 = arith.constant 0 : i32
    return %c0_i32, %c0_i32_0 : i32, i32
  }
  func.func @transform_7(%arg0: i32, %arg1: i32) -> (i32, i32) {
    %c0_i32 = arith.constant 0 : i32
    %c0_i32_0 = arith.constant 0 : i32
    %c0_i32_1 = arith.constant 0 : i32
    return %c0_i32, %c0_i32_0 : i32, i32
  }
  func.func @transform_8(%arg0: i32, %arg1: i32) -> (i32, i32) {
    %c0_i32 = arith.constant 0 : i32
    %c0_i32_0 = arith.constant 0 : i32
    return %arg0, %c0_i32 : i32, i32
  }
}

</mosaic_0001>

<llo_original>
// kernel: action_lstm_forward.1
$region0: #{action_lstm_forward.1}
  #allocation0 [shape = 'u32[]', space=smem, size = 0x4, offset = 0x4, fixed_abs, tag = 'smem constant byte address 0x4 - core index']
  #allocation1 [shape = 'u32[144,128]{1,0:T(1,128)}', space=vmem, size = 0x12000, scoped, tag = 'internal scratch']
  #allocation2 [shape = 'bf16[8,128]{1,0:T(8,128)(2,1)}', space=vmem, size = 0x800, scoped, tag = 'scratch operand']
  #allocation3 [shape = 'f32[8,128]{1,0:T(8,128)}', space=vmem, size = 0x1000, scoped, tag = 'scratch operand']
  #allocation4 [shape = 'f32[8,8,512]{2,1,0:T(8,128)}', space=vmem, size = 0x20000, scoped, tag = 'scratch operand']
  %s0 = inlined_call_operand.vmem [shape: bf16[8,8,128], index: 0, kind: input, shape index: {}]
  %s1 = inlined_call_operand.vmem [shape: bf16[128,512], index: 1, kind: input, shape index: {}]
  %s2 = inlined_call_operand.vmem [shape: bf16[128,512], index: 2, kind: input, shape index: {}]
  %s3 = inlined_call_operand.vmem [shape: f32[1,512], index: 3, kind: input, shape index: {}]
  %s4 = inlined_call_operand.vmem [shape: bf16[128,128], index: 4, kind: input, shape index: {}]
  %s5 = inlined_call_operand.vmem [shape: f32[1,128], index: 5, kind: input, shape index: {}]
  %s6 = inlined_call_operand.vmem [shape: bf16[128,128], index: 6, kind: input, shape index: {}]
  %s7 = inlined_call_operand.vmem [shape: f32[1,128], index: 7, kind: input, shape index: {}]
  %s8 = inlined_call_operand.vmem [shape: f32[8,128], index: 8, kind: output, shape index: {}]
  %s9 = sld [smem:[#allocation0]]
  $region50: #{action_lstm_forward.1} parent=0
    _
  %s11 = ssub.s32 1, %s9
  %s12 = scalar_select 0, %s11, %s9
  // Predicated region
  $region2: #{action_lstm_forward.1} parent=0 // pred_check
    _
  $region3: #{action_lstm_forward.1} parent=0 // pred_check_branch
    %14 = sbr.rel (0) target = $region5
  $region4: #{action_lstm_forward.1} parent=0 // pred_region
    _
  $region5: #{action_lstm_forward.1} parent=0 // pred_fallthru
    _
  // Predicated region
  $region6: #{action_lstm_forward.1} parent=0 // pred_check
    _
  $region7: #{action_lstm_forward.1} parent=0 // pred_check_branch
    %16 = sbr.rel (0) target = $region9
  $region8: #{action_lstm_forward.1} parent=0 // pred_region
    _
  $region9: #{action_lstm_forward.1} parent=0 // pred_fallthru
    _
  // Predicated region
  $region10: #{action_lstm_forward.1} parent=0 // pred_check
    _
  $region11: #{action_lstm_forward.1} parent=0 // pred_check_branch
    %18 = sbr.rel (0) target = $region13
  $region12: #{action_lstm_forward.1} parent=0 // pred_region
    _
  $region13: #{action_lstm_forward.1} parent=0 // pred_fallthru
    _
  // Predicated region
  $region14: #{action_lstm_forward.1} parent=0 // pred_check
    _
  $region15: #{action_lstm_forward.1} parent=0 // pred_check_branch
    %20 = sbr.rel (0) target = $region17
  $region16: #{action_lstm_forward.1} parent=0 // pred_region
    _
  $region17: #{action_lstm_forward.1} parent=0 // pred_fallthru
    _
  // Predicated region
  $region18: #{action_lstm_forward.1} parent=0 // pred_check
    _
  $region19: #{action_lstm_forward.1} parent=0 // pred_check_branch
    %22 = sbr.rel (0) target = $region21
  $region20: #{action_lstm_forward.1} parent=0 // pred_region
    _
  $region21: #{action_lstm_forward.1} parent=0 // pred_fallthru
    _
  // Predicated region
  $region22: #{action_lstm_forward.1} parent=0 // pred_check
    _
  $region23: #{action_lstm_forward.1} parent=0 // pred_check_branch
    %24 = sbr.rel (0) target = $region25
  $region24: #{action_lstm_forward.1} parent=0 // pred_region
    _
  $region25: #{action_lstm_forward.1} parent=0 // pred_fallthru
    _
  // Predicated region
  $region26: #{action_lstm_forward.1} parent=0 // pred_check
    _
  $region27: #{action_lstm_forward.1} parent=0 // pred_check_branch
    %26 = sbr.rel (0) target = $region29
  $region28: #{action_lstm_forward.1} parent=0 // pred_region
    _
  $region29: #{action_lstm_forward.1} parent=0 // pred_fallthru
    _
  // Predicated region
  $region30: #{action_lstm_forward.1} parent=0 // pred_check
    _
  $region31: #{action_lstm_forward.1} parent=0 // pred_check_branch
    %28 = sbr.rel (0) target = $region33
  $region32: #{action_lstm_forward.1} parent=0 // pred_region
    _
  $region33: #{action_lstm_forward.1} parent=0 // pred_fallthru
    _
  %p30 = scmp.eq.s32.totalorder 0, 0
  // Predicated region
  $region34: #{action_lstm_forward.1} parent=0 // pred_check
    %p31 = pneg %p30
  $region35: #{action_lstm_forward.1} parent=0 // pred_check_branch
    %33 = sbr.rel (%p31) target = $region37
  $region36: #{action_lstm_forward.1} parent=0 // pred_region
    %34 = vst [vmem:[#allocation2] sm:$0xf] 0
    %35 = vst [vmem:[#allocation3] sm:$0xff] 0.0
  $region37: #{action_lstm_forward.1} parent=0 // pred_fallthru
    _
  %v36 = vld [vmem:[%s2] sm:$0xff]
  %v37 = vld [vmem:[%s2 + $0x8] sm:$0xff]
  %v38 = vld [vmem:[%s2 + $0x10] sm:$0xff]
  %v39 = vld [vmem:[%s2 + $0x18] sm:$0xff]
  %v40 = vld [vmem:[%s2 + $0x20] sm:$0xff]
  %v41 = vld [vmem:[%s2 + $0x28] sm:$0xff]
  %v42 = vld [vmem:[%s2 + $0x30] sm:$0xff]
  %v43 = vld [vmem:[%s2 + $0x38] sm:$0xff]
  %v44 = vld [vmem:[%s2 + $0x40] sm:$0xff]
  %v45 = vld [vmem:[%s2 + $0x48] sm:$0xff]
  %v46 = vld [vmem:[%s2 + $0x50] sm:$0xff]
  %v47 = vld [vmem:[%s2 + $0x58] sm:$0xff]
  %v48 = vld [vmem:[%s2 + $0x60] sm:$0xff]
  %v49 = vld [vmem:[%s2 + $0x68] sm:$0xff]
  %v50 = vld [vmem:[%s2 + $0x70] sm:$0xff]
  %v51 = vld [vmem:[%s2 + $0x78] sm:$0xff]
  %v52 = vld [vmem:[%s2 + $0x80] sm:$0xff]
  %v53 = vld [vmem:[%s2 + $0x88] sm:$0xff]
  %v54 = vld [vmem:[%s2 + $0x90] sm:$0xff]
  %v55 = vld [vmem:[%s2 + $0x98] sm:$0xff]
  %v56 = vld [vmem:[%s2 + $0xa0] sm:$0xff]
  %v57 = vld [vmem:[%s2 + $0xa8] sm:$0xff]
  %v58 = vld [vmem:[%s2 + $0xb0] sm:$0xff]
  %v59 = vld [vmem:[%s2 + $0xb8] sm:$0xff]
  %v60 = vld [vmem:[%s2 + $0xc0] sm:$0xff]
  %v61 = vld [vmem:[%s2 + $0xc8] sm:$0xff]
  %v62 = vld [vmem:[%s2 + $0xd0] sm:$0xff]
  %v63 = vld [vmem:[%s2 + $0xd8] sm:$0xff]
  %v64 = vld [vmem:[%s2 + $0xe0] sm:$0xff]
  %v65 = vld [vmem:[%s2 + $0xe8] sm:$0xff]
  %v66 = vld [vmem:[%s2 + $0xf0] sm:$0xff]
  %v67 = vld [vmem:[%s2 + $0xf8] sm:$0xff]
  %v68 = vld [vmem:[%s3] sm:$0xf]
  %v69 = vld [vmem:[#allocation2] sm:$0xf]
  %v70 = vld [vmem:[#allocation3] sm:$0xff]
  %v71 = vld [vmem:[%s0] sm:$0xf]
  %v72 = vld [vmem:[%s0 + $0x4] sm:$0xf]
  %v73 = vld [vmem:[%s0 + $0x8] sm:$0xf]
  %v74 = vld [vmem:[%s0 + $0xc] sm:$0xf]
  %v75 = vld [vmem:[%s0 + $0x10] sm:$0xf]
  %v76 = vld [vmem:[%s0 + $0x14] sm:$0xf]
  %v77 = vld [vmem:[%s0 + $0x18] sm:$0xf]
  %v78 = vld [vmem:[%s0 + $0x1c] sm:$0xf]
  %v79 = vld [vmem:[%s1] sm:$0xff]
  %v80 = vld [vmem:[%s1 + $0x8] sm:$0xff]
  %v81 = vld [vmem:[%s1 + $0x10] sm:$0xff]
  %v82 = vld [vmem:[%s1 + $0x18] sm:$0xff]
  %v83 = vld [vmem:[%s1 + $0x20] sm:$0xff]
  %v84 = vld [vmem:[%s1 + $0x28] sm:$0xff]
  %v85 = vld [vmem:[%s1 + $0x30] sm:$0xff]
  %v86 = vld [vmem:[%s1 + $0x38] sm:$0xff]
  %v87 = vld [vmem:[%s1 + $0x40] sm:$0xff]
  %v88 = vld [vmem:[%s1 + $0x48] sm:$0xff]
  %v89 = vld [vmem:[%s1 + $0x50] sm:$0xff]
  %v90 = vld [vmem:[%s1 + $0x58] sm:$0xff]
  %v91 = vld [vmem:[%s1 + $0x60] sm:$0xff]
  %v92 = vld [vmem:[%s1 + $0x68] sm:$0xff]
  %v93 = vld [vmem:[%s1 + $0x70] sm:$0xff]
  %v94 = vld [vmem:[%s1 + $0x78] sm:$0xff]
  %v95 = vld [vmem:[%s1 + $0x80] sm:$0xff]
  %v96 = vld [vmem:[%s1 + $0x88] sm:$0xff]
  %v97 = vld [vmem:[%s1 + $0x90] sm:$0xff]
  %v98 = vld [vmem:[%s1 + $0x98] sm:$0xff]
  %v99 = vld [vmem:[%s1 + $0xa0] sm:$0xff]
  %v100 = vld [vmem:[%s1 + $0xa8] sm:$0xff]
  %v101 = vld [vmem:[%s1 + $0xb0] sm:$0xff]
  %v102 = vld [vmem:[%s1 + $0xb8] sm:$0xff]
  %v103 = vld [vmem:[%s1 + $0xc0] sm:$0xff]
  %v104 = vld [vmem:[%s1 + $0xc8] sm:$0xff]
  %v105 = vld [vmem:[%s1 + $0xd0] sm:$0xff]
  %v106 = vld [vmem:[%s1 + $0xd8] sm:$0xff]
  %v107 = vld [vmem:[%s1 + $0xe0] sm:$0xff]
  %v108 = vld [vmem:[%s1 + $0xe8] sm:$0xff]
  %v109 = vld [vmem:[%s1 + $0xf0] sm:$0xff]
  %v110 = vld [vmem:[%s1 + $0xf8] sm:$0xff]
  %v112 = vlaneseq
  %v113 = vshrl.u32 %v112, 7
  %v114 = vsub.s32 0, %v113
  %v115 = vrot.slane %v68, %v114
  %v116 = vlaneseq
  %v117 = vshrl.u32 %v116, 7
  %v118 = vsub.s32 1, %v117
  %v119 = vrot.slane %v68, %v118
  %v120 = vlaneseq
  %v121 = vshrl.u32 %v120, 7
  %v122 = vsub.s32 2, %v121
  %v123 = vrot.slane %v68, %v122
  %v124 = vlaneseq
  %v125 = vshrl.u32 %v124, 7
  %v126 = vsub.s32 3, %v125
  %v127 = vrot.slane %v68, %v126
  %v140 = vunpack.c.l.b16 %v71
  %v141 = vunpack.c.l.b16 %v72
  %v142 = vunpack.c.l.b16 %v73
  %v143 = vunpack.c.l.b16 %v74
  %v144 = vunpack.c.l.b16 %v75
  %v145 = vunpack.c.l.b16 %v76
  %v146 = vunpack.c.l.b16 %v77
  %v147 = vunpack.c.l.b16 %v78
  %v148 = vpack.c.b16 %v141, %v140
  %v149 = vpack.c.b16 %v143, %v142
  %v150 = vpack.c.b16 %v145, %v144
  %v151 = vpack.c.b16 %v147, %v146
  %v188 = vunpack.c.l.b16 %v79
  %v189 = vunpack.c.h.b16 %v79
  %v190 = vunpack.c.l.b16 %v80
  %v191 = vunpack.c.h.b16 %v80
  %v192 = vunpack.c.l.b16 %v81
  %v193 = vunpack.c.h.b16 %v81
  %v194 = vunpack.c.l.b16 %v82
  %v195 = vunpack.c.h.b16 %v82
  %v196 = vunpack.c.l.b16 %v83
  %v197 = vunpack.c.h.b16 %v83
  %v198 = vunpack.c.l.b16 %v84
  %v199 = vunpack.c.h.b16 %v84
  %v200 = vunpack.c.l.b16 %v85
  %v201 = vunpack.c.h.b16 %v85
  %v202 = vunpack.c.l.b16 %v86
  %v203 = vunpack.c.h.b16 %v86
  %v204 = vunpack.c.l.b16 %v87
  %v205 = vunpack.c.h.b16 %v87
  %v206 = vunpack.c.l.b16 %v88
  %v207 = vunpack.c.h.b16 %v88
  %v208 = vunpack.c.l.b16 %v89
  %v209 = vunpack.c.h.b16 %v89
  %v210 = vunpack.c.l.b16 %v90
  %v211 = vunpack.c.h.b16 %v90
  %v212 = vunpack.c.l.b16 %v91
  %v213 = vunpack.c.h.b16 %v91
  %v214 = vunpack.c.l.b16 %v92
  %v215 = vunpack.c.h.b16 %v92
  %v216 = vunpack.c.l.b16 %v93
  %v217 = vunpack.c.h.b16 %v93
  %v218 = vunpack.c.l.b16 %v94
  %v219 = vunpack.c.h.b16 %v94
  %v220 = vunpack.c.l.b16 %v95
  %v221 = vunpack.c.h.b16 %v95
  %v222 = vunpack.c.l.b16 %v96
  %v223 = vunpack.c.h.b16 %v96
  %v224 = vunpack.c.l.b16 %v97
  %v225 = vunpack.c.h.b16 %v97
  %v226 = vunpack.c.l.b16 %v98
  %v227 = vunpack.c.h.b16 %v98
  %v228 = vunpack.c.l.b16 %v99
  %v229 = vunpack.c.h.b16 %v99
  %v230 = vunpack.c.l.b16 %v100
  %v231 = vunpack.c.h.b16 %v100
  %v232 = vunpack.c.l.b16 %v101
  %v233 = vunpack.c.h.b16 %v101
  %v234 = vunpack.c.l.b16 %v102
  %v235 = vunpack.c.h.b16 %v102
  %v236 = vunpack.c.l.b16 %v103
  %v237 = vunpack.c.h.b16 %v103
  %v238 = vunpack.c.l.b16 %v104
  %v239 = vunpack.c.h.b16 %v104
  %v240 = vunpack.c.l.b16 %v105
  %v241 = vunpack.c.h.b16 %v105
  %v242 = vunpack.c.l.b16 %v106
  %v243 = vunpack.c.h.b16 %v106
  %v244 = vunpack.c.l.b16 %v107
  %v245 = vunpack.c.h.b16 %v107
  %v246 = vunpack.c.l.b16 %v108
  %v247 = vunpack.c.h.b16 %v108
  %v248 = vunpack.c.l.b16 %v109
  %v249 = vunpack.c.h.b16 %v109
  %v250 = vunpack.c.l.b16 %v110
  %v251 = vunpack.c.h.b16 %v110
  %v252 = vpack.c.b16 %v192, %v188
  %v253 = vpack.c.b16 %v193, %v189
  %v254 = vpack.c.b16 %v194, %v190
  %v255 = vpack.c.b16 %v195, %v191
  %v256 = vpack.c.b16 %v200, %v196
  %v257 = vpack.c.b16 %v201, %v197
  %v258 = vpack.c.b16 %v202, %v198
  %v259 = vpack.c.b16 %v203, %v199
  %v260 = vpack.c.b16 %v208, %v204
  %v261 = vpack.c.b16 %v209, %v205
  %v262 = vpack.c.b16 %v210, %v206
  %v263 = vpack.c.b16 %v211, %v207
  %v264 = vpack.c.b16 %v216, %v212
  %v265 = vpack.c.b16 %v217, %v213
  %v266 = vpack.c.b16 %v218, %v214
  %v267 = vpack.c.b16 %v219, %v215
  %v268 = vpack.c.b16 %v224, %v220
  %v269 = vpack.c.b16 %v225, %v221
  %v270 = vpack.c.b16 %v226, %v222
  %v271 = vpack.c.b16 %v227, %v223
  %v272 = vpack.c.b16 %v232, %v228
  %v273 = vpack.c.b16 %v233, %v229
  %v274 = vpack.c.b16 %v234, %v230
  %v275 = vpack.c.b16 %v235, %v231
  %v276 = vpack.c.b16 %v240, %v236
  %v277 = vpack.c.b16 %v241, %v237
  %v278 = vpack.c.b16 %v242, %v238
  %v279 = vpack.c.b16 %v243, %v239
  %v280 = vpack.c.b16 %v248, %v244
  %v281 = vpack.c.b16 %v249, %v245
  %v282 = vpack.c.b16 %v250, %v246
  %v283 = vpack.c.b16 %v251, %v247
  %316 = vmatprep.subr.bf16.mxu0 %v253
  %317 = vmatpush1.bf16.msra.mxu0 %v252
  %318 = vmatprep.subr.bf16.mxu0 %v257
  %319 = vmatpush1.bf16.msra.mxu0 %v256
  %320 = vmatprep.subr.bf16.mxu0 %v261
  %321 = vmatpush1.bf16.msra.mxu0 %v260
  %322 = vmatprep.subr.bf16.mxu0 %v265
  %323 = vmatpush1.bf16.msra.mxu0 %v264
  %324 = vmatprep.subr.bf16.mxu0 %v269
  %325 = vmatpush1.bf16.msra.mxu0 %v268
  %326 = vmatprep.subr.bf16.mxu0 %v273
  %327 = vmatpush1.bf16.msra.mxu0 %v272
  %328 = vmatprep.subr.bf16.mxu0 %v277
  %329 = vmatpush1.bf16.msra.mxu0 %v276
  %330 = vmatprep.subr.bf16.mxu0 %v281
  %331 = vmatpush1.bf16.msra.mxu0 %v280
  %332 = vmatprep.subr.bf16.mxu0 0
  %333 = vmatpush1.bf16.msra.mxu0 0
  %334 = vmatprep.subr.bf16.mxu0 0
  %335 = vmatpush1.bf16.msra.mxu0 0
  %336 = vmatprep.subr.bf16.mxu0 0
  %337 = vmatpush1.bf16.msra.mxu0 0
  %338 = vmatprep.subr.bf16.mxu0 0
  %339 = vmatpush1.bf16.msra.mxu0 0
  %340 = vmatprep.subr.bf16.mxu0 0
  %341 = vmatpush1.bf16.msra.mxu0 0
  %342 = vmatprep.subr.bf16.mxu0 0
  %343 = vmatpush1.bf16.msra.mxu0 0
  %344 = vmatprep.subr.bf16.mxu0 0
  %345 = vmatpush1.bf16.msra.mxu0 0
  %346 = vmatprep.subr.bf16.mxu0 0
  %347 = vmatpush1.bf16.msra.mxu0 0
  %348 = vmatprep.mubr.bf16.mxu0 0
  %349 = vmatmul.mubr.bf16.gmra.mrb[0].mxu0 %v148
  %v350 = vpop.f32.mrb[0].mxu0
  %v351 = vadd.f32 %v115, %v350
  %v352 = vpop.f32.mrb[0].mxu0
  %v353 = vadd.f32 %v119, %v352
  %v354 = vpop.f32.mrb[0].mxu0
  %v355 = vadd.f32 %v115, %v354
  %v356 = vpop.f32.mrb[0].mxu0
  %v357 = vadd.f32 %v119, %v356
  %358 = vmatprep.mubr.bf16.mxu0 0
  %359 = vmatmul.mubr.bf16.gmra.mrb[0].mxu0 %v149
  %v360 = vpop.f32.mrb[0].mxu0
  %v361 = vadd.f32 %v115, %v360
  %v362 = vpop.f32.mrb[0].mxu0
  %v363 = vadd.f32 %v119, %v362
  %v364 = vpop.f32.mrb[0].mxu0
  %v365 = vadd.f32 %v115, %v364
  %v366 = vpop.f32.mrb[0].mxu0
  %v367 = vadd.f32 %v119, %v366
  %368 = vmatprep.mubr.bf16.mxu0 0
  %369 = vmatmul.mubr.bf16.gmra.mrb[0].mxu0 %v150
  %v370 = vpop.f32.mrb[0].mxu0
  %v371 = vadd.f32 %v115, %v370
  %v372 = vpop.f32.mrb[0].mxu0
  %v373 = vadd.f32 %v119, %v372
  %v374 = vpop.f32.mrb[0].mxu0
  %v375 = vadd.f32 %v115, %v374
  %v376 = vpop.f32.mrb[0].mxu0
  %v377 = vadd.f32 %v119, %v376
  %378 = vmatprep.mubr.bf16.mxu0 0
  %379 = vmatmul.mubr.bf16.gmra.mrb[0].mxu0 %v151
  %v380 = vpop.f32.mrb[0].mxu0
  %v381 = vadd.f32 %v115, %v380
  %v382 = vpop.f32.mrb[0].mxu0
  %v383 = vadd.f32 %v119, %v382
  %v384 = vpop.f32.mrb[0].mxu0
  %v385 = vadd.f32 %v115, %v384
  %v386 = vpop.f32.mrb[0].mxu0
  %v387 = vadd.f32 %v119, %v386
  %388 = vdwg.mxu0
  %389 = vmatprep.subr.bf16.mxu0 %v255
  %390 = vmatpush1.bf16.msra.mxu0 %v254
  %391 = vmatprep.subr.bf16.mxu0 %v259
  %392 = vmatpush1.bf16.msra.mxu0 %v258
  %393 = vmatprep.subr.bf16.mxu0 %v263
  %394 = vmatpush1.bf16.msra.mxu0 %v262
  %395 = vmatprep.subr.bf16.mxu0 %v267
  %396 = vmatpush1.bf16.msra.mxu0 %v266
  %397 = vmatprep.subr.bf16.mxu0 %v271
  %398 = vmatpush1.bf16.msra.mxu0 %v270
  %399 = vmatprep.subr.bf16.mxu0 %v275
  %400 = vmatpush1.bf16.msra.mxu0 %v274
  %401 = vmatprep.subr.bf16.mxu0 %v279
  %402 = vmatpush1.bf16.msra.mxu0 %v278
  %403 = vmatprep.subr.bf16.mxu0 %v283
  %404 = vmatpush1.bf16.msra.mxu0 %v282
  %405 = vmatprep.subr.bf16.mxu0 0
  %406 = vmatpush1.bf16.msra.mxu0 0
  %407 = vmatprep.subr.bf16.mxu0 0
  %408 = vmatpush1.bf16.msra.mxu0 0
  %409 = vmatprep.subr.bf16.mxu0 0
  %410 = vmatpush1.bf16.msra.mxu0 0
  %411 = vmatprep.subr.bf16.mxu0 0
  %412 = vmatpush1.bf16.msra.mxu0 0
  %413 = vmatprep.subr.bf16.mxu0 0
  %414 = vmatpush1.bf16.msra.mxu0 0
  %415 = vmatprep.subr.bf16.mxu0 0
  %416 = vmatpush1.bf16.msra.mxu0 0
  %417 = vmatprep.subr.bf16.mxu0 0
  %418 = vmatpush1.bf16.msra.mxu0 0
  %419 = vmatprep.subr.bf16.mxu0 0
  %420 = vmatpush1.bf16.msra.mxu0 0
  %421 = vmatprep.mubr.bf16.mxu0 0
  %422 = vmatmul.mubr.bf16.gmra.mrb[0].mxu0 %v148
  %v423 = vpop.f32.mrb[0].mxu0
  %v424 = vadd.f32 %v123, %v423
  %v425 = vpop.f32.mrb[0].mxu0
  %v426 = vadd.f32 %v127, %v425
  %v427 = vpop.f32.mrb[0].mxu0
  %v428 = vadd.f32 %v123, %v427
  %v429 = vpop.f32.mrb[0].mxu0
  %v430 = vadd.f32 %v127, %v429
  %431 = vmatprep.mubr.bf16.mxu0 0
  %432 = vmatmul.mubr.bf16.gmra.mrb[0].mxu0 %v149
  %v433 = vpop.f32.mrb[0].mxu0
  %v434 = vadd.f32 %v123, %v433
  %v435 = vpop.f32.mrb[0].mxu0
  %v436 = vadd.f32 %v127, %v435
  %v437 = vpop.f32.mrb[0].mxu0
  %v438 = vadd.f32 %v123, %v437
  %v439 = vpop.f32.mrb[0].mxu0
  %v440 = vadd.f32 %v127, %v439
  %441 = vmatprep.mubr.bf16.mxu0 0
  %442 = vmatmul.mubr.bf16.gmra.mrb[0].mxu0 %v150
  %v443 = vpop.f32.mrb[0].mxu0
  %v444 = vadd.f32 %v123, %v443
  %v445 = vpop.f32.mrb[0].mxu0
  %v446 = vadd.f32 %v127, %v445
  %v447 = vpop.f32.mrb[0].mxu0
  %v448 = vadd.f32 %v123, %v447
  %v449 = vpop.f32.mrb[0].mxu0
  %v450 = vadd.f32 %v127, %v449
  %451 = vmatprep.mubr.bf16.mxu0 0
  %452 = vmatmul.mubr.bf16.gmra.mrb[0].mxu0 %v151
  %v453 = vpop.f32.mrb[0].mxu0
  %v454 = vadd.f32 %v123, %v453
  %v455 = vpop.f32.mrb[0].mxu0
  %v456 = vadd.f32 %v127, %v455
  %v457 = vpop.f32.mrb[0].mxu0
  %v458 = vadd.f32 %v123, %v457
  %v459 = vpop.f32.mrb[0].mxu0
  %v460 = vadd.f32 %v127, %v459
  %461 = vdwg.mxu0
  %462 = vst [vmem:[#allocation4] sm:$0xff] %v351
  %463 = vst [vmem:[#allocation4 + $0x8] sm:$0xff] %v353
  %464 = vst [vmem:[#allocation4 + $0x10] sm:$0xff] %v424
  %465 = vst [vmem:[#allocation4 + $0x18] sm:$0xff] %v426
  %466 = vst [vmem:[#allocation4 + $0x20] sm:$0xff] %v355
  %467 = vst [vmem:[#allocation4 + $0x28] sm:$0xff] %v357
  %468 = vst [vmem:[#allocation4 + $0x30] sm:$0xff] %v428
  %469 = vst [vmem:[#allocation4 + $0x38] sm:$0xff] %v430
  %470 = vst [vmem:[#allocation4 + $0x40] sm:$0xff] %v361
  %471 = vst [vmem:[#allocation4 + $0x48] sm:$0xff] %v363
  %472 = vst [vmem:[#allocation4 + $0x50] sm:$0xff] %v434
  %473 = vst [vmem:[#allocation4 + $0x58] sm:$0xff] %v436
  %474 = vst [vmem:[#allocation4 + $0x60] sm:$0xff] %v365
  %475 = vst [vmem:[#allocation4 + $0x68] sm:$0xff] %v367
  %476 = vst [vmem:[#allocation4 + $0x70] sm:$0xff] %v438
  %477 = vst [vmem:[#allocation4 + $0x78] sm:$0xff] %v440
  %478 = vst [vmem:[#allocation4 + $0x80] sm:$0xff] %v371
  %479 = vst [vmem:[#allocation4 + $0x88] sm:$0xff] %v373
  %480 = vst [vmem:[#allocation4 + $0x90] sm:$0xff] %v444
  %481 = vst [vmem:[#allocation4 + $0x98] sm:$0xff] %v446
  %482 = vst [vmem:[#allocation4 + $0xa0] sm:$0xff] %v375
  %483 = vst [vmem:[#allocation4 + $0xa8] sm:$0xff] %v377
  %484 = vst [vmem:[#allocation4 + $0xb0] sm:$0xff] %v448
  %485 = vst [vmem:[#allocation4 + $0xb8] sm:$0xff] %v450
  %486 = vst [vmem:[#allocation4 + $0xc0] sm:$0xff] %v381
  %487 = vst [vmem:[#allocation4 + $0xc8] sm:$0xff] %v383
  %488 = vst [vmem:[#allocation4 + $0xd0] sm:$0xff] %v454
  %489 = vst [vmem:[#allocation4 + $0xd8] sm:$0xff] %v456
  %490 = vst [vmem:[#allocation4 + $0xe0] sm:$0xff] %v385
  %491 = vst [vmem:[#allocation4 + $0xe8] sm:$0xff] %v387
  %492 = vst [vmem:[#allocation4 + $0xf0] sm:$0xff] %v458
  %493 = vst [vmem:[#allocation4 + $0xf8] sm:$0xff] %v460
  %v494 = vld [vmem:[#allocation4] sm:$0xff]
  %v495 = vld [vmem:[#allocation4 + $0x8] sm:$0xff]
  %v496 = vld [vmem:[#allocation4 + $0x10] sm:$0xff]
  %v497 = vld [vmem:[#allocation4 + $0x18] sm:$0xff]
  %v530 = vunpack.c.l.b16 %v36
  %v531 = vunpack.c.h.b16 %v36
  %v532 = vunpack.c.l.b16 %v37
  %v533 = vunpack.c.h.b16 %v37
  %v534 = vunpack.c.l.b16 %v38
  %v535 = vunpack.c.h.b16 %v38
  %v536 = vunpack.c.l.b16 %v39
  %v537 = vunpack.c.h.b16 %v39
  %v538 = vunpack.c.l.b16 %v40
  %v539 = vunpack.c.h.b16 %v40
  %v540 = vunpack.c.l.b16 %v41
  %v541 = vunpack.c.h.b16 %v41
  %v542 = vunpack.c.l.b16 %v42
  %v543 = vunpack.c.h.b16 %v42
  %v544 = vunpack.c.l.b16 %v43
  %v545 = vunpack.c.h.b16 %v43
  %v546 = vunpack.c.l.b16 %v44
  %v547 = vunpack.c.h.b16 %v44
  %v548 = vunpack.c.l.b16 %v45
  %v549 = vunpack.c.h.b16 %v45
  %v550 = vunpack.c.l.b16 %v46
  %v551 = vunpack.c.h.b16 %v46
  %v552 = vunpack.c.l.b16 %v47
  %v553 = vunpack.c.h.b16 %v47
  %v554 = vunpack.c.l.b16 %v48
  %v555 = vunpack.c.h.b16 %v48
  %v556 = vunpack.c.l.b16 %v49
  %v557 = vunpack.c.h.b16 %v49
  %v558 = vunpack.c.l.b16 %v50
  %v559 = vunpack.c.h.b16 %v50
  %v560 = vunpack.c.l.b16 %v51
  %v561 = vunpack.c.h.b16 %v51
  %v562 = vunpack.c.l.b16 %v52
  %v563 = vunpack.c.h.b16 %v52
  %v564 = vunpack.c.l.b16 %v53
  %v565 = vunpack.c.h.b16 %v53
  %v566 = vunpack.c.l.b16 %v54
  %v567 = vunpack.c.h.b16 %v54
  %v568 = vunpack.c.l.b16 %v55
  %v569 = vunpack.c.h.b16 %v55
  %v570 = vunpack.c.l.b16 %v56
  %v571 = vunpack.c.h.b16 %v56
  %v572 = vunpack.c.l.b16 %v57
  %v573 = vunpack.c.h.b16 %v57
  %v574 = vunpack.c.l.b16 %v58
  %v575 = vunpack.c.h.b16 %v58
  %v576 = vunpack.c.l.b16 %v59
  %v577 = vunpack.c.h.b16 %v59
  %v578 = vunpack.c.l.b16 %v60
  %v579 = vunpack.c.h.b16 %v60
  %v580 = vunpack.c.l.b16 %v61
  %v581 = vunpack.c.h.b16 %v61
  %v582 = vunpack.c.l.b16 %v62
  %v583 = vunpack.c.h.b16 %v62
  %v584 = vunpack.c.l.b16 %v63
  %v585 = vunpack.c.h.b16 %v63
  %v586 = vunpack.c.l.b16 %v64
  %v587 = vunpack.c.h.b16 %v64
  %v588 = vunpack.c.l.b16 %v65
  %v589 = vunpack.c.h.b16 %v65
  %v590 = vunpack.c.l.b16 %v66
  %v591 = vunpack.c.h.b16 %v66
  %v592 = vunpack.c.l.b16 %v67
  %v593 = vunpack.c.h.b16 %v67
  %v594 = vpack.c.b16 %v534, %v530
  %v595 = vpack.c.b16 %v535, %v531
  %v596 = vpack.c.b16 %v536, %v532
  %v597 = vpack.c.b16 %v537, %v533
  %v598 = vpack.c.b16 %v542, %v538
  %v599 = vpack.c.b16 %v543, %v539
  %v600 = vpack.c.b16 %v544, %v540
  %v601 = vpack.c.b16 %v545, %v541
  %v602 = vpack.c.b16 %v550, %v546
  %v603 = vpack.c.b16 %v551, %v547
  %v604 = vpack.c.b16 %v552, %v548
  %v605 = vpack.c.b16 %v553, %v549
  %v606 = vpack.c.b16 %v558, %v554
  %v607 = vpack.c.b16 %v559, %v555
  %v608 = vpack.c.b16 %v560, %v556
  %v609 = vpack.c.b16 %v561, %v557
  %v610 = vpack.c.b16 %v566, %v562
  %v611 = vpack.c.b16 %v567, %v563
  %v612 = vpack.c.b16 %v568, %v564
  %v613 = vpack.c.b16 %v569, %v565
  %v614 = vpack.c.b16 %v574, %v570
  %v615 = vpack.c.b16 %v575, %v571
  %v616 = vpack.c.b16 %v576, %v572
  %v617 = vpack.c.b16 %v577, %v573
  %v618 = vpack.c.b16 %v582, %v578
  %v619 = vpack.c.b16 %v583, %v579
  %v620 = vpack.c.b16 %v584, %v580
  %v621 = vpack.c.b16 %v585, %v581
  %v622 = vpack.c.b16 %v590, %v586
  %v623 = vpack.c.b16 %v591, %v587
  %v624 = vpack.c.b16 %v592, %v588
  %v625 = vpack.c.b16 %v593, %v589
  %658 = vmatprep.subr.bf16.mxu0 %v595
  %659 = vmatpush1.bf16.msra.mxu0 %v594
  %660 = vmatprep.subr.bf16.mxu0 %v599
  %661 = vmatpush1.bf16.msra.mxu0 %v598
  %662 = vmatprep.subr.bf16.mxu0 %v603
  %663 = vmatpush1.bf16.msra.mxu0 %v602
  %664 = vmatprep.subr.bf16.mxu0 %v607
  %665 = vmatpush1.bf16.msra.mxu0 %v606
  %666 = vmatprep.subr.bf16.mxu0 %v611
  %667 = vmatpush1.bf16.msra.mxu0 %v610
  %668 = vmatprep.subr.bf16.mxu0 %v615
  %669 = vmatpush1.bf16.msra.mxu0 %v614
  %670 = vmatprep.subr.bf16.mxu0 %v619
  %671 = vmatpush1.bf16.msra.mxu0 %v618
  %672 = vmatprep.subr.bf16.mxu0 %v623
  %673 = vmatpush1.bf16.msra.mxu0 %v622
  %674 = vmatprep.subr.bf16.mxu0 0
  %675 = vmatpush1.bf16.msra.mxu0 0
  %676 = vmatprep.subr.bf16.mxu0 0
  %677 = vmatpush1.bf16.msra.mxu0 0
  %678 = vmatprep.subr.bf16.mxu0 0
  %679 = vmatpush1.bf16.msra.mxu0 0
  %680 = vmatprep.subr.bf16.mxu0 0
  %681 = vmatpush1.bf16.msra.mxu0 0
  %682 = vmatprep.subr.bf16.mxu0 0
  %683 = vmatpush1.bf16.msra.mxu0 0
  %684 = vmatprep.subr.bf16.mxu0 0
  %685 = vmatpush1.bf16.msra.mxu0 0
  %686 = vmatprep.subr.bf16.mxu0 0
  %687 = vmatpush1.bf16.msra.mxu0 0
  %688 = vmatprep.subr.bf16.mxu0 0
  %689 = vmatpush1.bf16.msra.mxu0 0
  %690 = vmatprep.mubr.bf16.mxu0 0
  %691 = vmatmul.mubr.bf16.gmra.mrb[0].mxu0 %v69
  %v692 = vpop.f32.mrb[0].mxu0
  %v693 = vadd.f32 0.0, %v692
  %v694 = vpop.f32.mrb[0].mxu0
  %v695 = vadd.f32 0.0, %v694
  %v696 = vpop.f32.mrb[0].mxu0
  %v697 = vpop.f32.mrb[0].mxu0
  %698 = vdwg.mxu0
  %699 = vmatprep.subr.bf16.mxu0 %v597
  %700 = vmatpush1.bf16.msra.mxu0 %v596
  %701 = vmatprep.subr.bf16.mxu0 %v601
  %702 = vmatpush1.bf16.msra.mxu0 %v600
  %703 = vmatprep.subr.bf16.mxu0 %v605
  %704 = vmatpush1.bf16.msra.mxu0 %v604
  %705 = vmatprep.subr.bf16.mxu0 %v609
  %706 = vmatpush1.bf16.msra.mxu0 %v608
  %707 = vmatprep.subr.bf16.mxu0 %v613
  %708 = vmatpush1.bf16.msra.mxu0 %v612
  %709 = vmatprep.subr.bf16.mxu0 %v617
  %710 = vmatpush1.bf16.msra.mxu0 %v616
  %711 = vmatprep.subr.bf16.mxu0 %v621
  %712 = vmatpush1.bf16.msra.mxu0 %v620
  %713 = vmatprep.subr.bf16.mxu0 %v625
  %714 = vmatpush1.bf16.msra.mxu0 %v624
  %715 = vmatprep.subr.bf16.mxu0 0
  %716 = vmatpush1.bf16.msra.mxu0 0
  %717 = vmatprep.subr.bf16.mxu0 0
  %718 = vmatpush1.bf16.msra.mxu0 0
  %719 = vmatprep.subr.bf16.mxu0 0
  %720 = vmatpush1.bf16.msra.mxu0 0
  %721 = vmatprep.subr.bf16.mxu0 0
  %722 = vmatpush1.bf16.msra.mxu0 0
  %723 = vmatprep.subr.bf16.mxu0 0
  %724 = vmatpush1.bf16.msra.mxu0 0
  %725 = vmatprep.subr.bf16.mxu0 0
  %726 = vmatpush1.bf16.msra.mxu0 0
  %727 = vmatprep.subr.bf16.mxu0 0
  %728 = vmatpush1.bf16.msra.mxu0 0
  %729 = vmatprep.subr.bf16.mxu0 0
  %730 = vmatpush1.bf16.msra.mxu0 0
  %731 = vmatprep.mubr.bf16.mxu0 0
  %732 = vmatmul.mubr.bf16.gmra.mrb[0].mxu0 %v69
  %v733 = vpop.f32.mrb[0].mxu0
  %v734 = vadd.f32 0.0, %v733
  %v735 = vpop.f32.mrb[0].mxu0
  %v736 = vadd.f32 0.0, %v735
  %v737 = vpop.f32.mrb[0].mxu0
  %v738 = vpop.f32.mrb[0].mxu0
  %739 = vdwg.mxu0
  %v740 = vadd.f32 %v494, %v693
  %v741 = vadd.f32 %v495, %v695
  %v742 = vadd.f32 %v496, %v734
  %v743 = vadd.f32 %v497, %v736
  %v744 = vxor.u32 %v740, 2147483648
  %v745 = vmul.f32 %v744, 1.442695
  %v746 = vpow.pop %v745
  %v747 = vadd.f32 %v746, 1.0
  %v748 = vrcp.pop %v747
  %v749 = vmul.f32 1.0, %v748
  %v750 = vxor.u32 %v741, 2147483648
  %v751 = vmul.f32 %v750, 1.442695
  %v752 = vpow.pop %v751
  %v753 = vadd.f32 %v752, 1.0
  %v754 = vrcp.pop %v753
  %v755 = vmul.f32 1.0, %v754
  %v756 = vtanh.pop %v742
  %v757 = vxor.u32 %v743, 2147483648
  %v758 = vmul.f32 %v757, 1.442695
  %v759 = vpow.pop %v758
  %v760 = vadd.f32 %v759, 1.0
  %v761 = vrcp.pop %v760
  %v762 = vmul.f32 1.0, %v761
  %v763 = vmul.f32 %v755, %v70
  %v764 = vmul.f32 %v749, %v756
  %v765 = vadd.f32 %v763, %v764
  %v766 = vtanh.pop %v765
  %v767 = vmul.f32 %v762, %v766
  %v768 = vpack.c.bf16 %v767, %v767
  %s769 = scalar_lea.vmem [#allocation4], 32
  %v770 = vld [vmem:[%s769] sm:$0xff]
  %v771 = vld [vmem:[%s769 + $0x8] sm:$0xff]
  %v772 = vld [vmem:[%s769 + $0x10] sm:$0xff]
  %v773 = vld [vmem:[%s769 + $0x18] sm:$0xff]
  %774 = vmatprep.subr.bf16.mxu0 %v595
  %775 = vmatpush1.bf16.msra.mxu0 %v594
  %776 = vmatprep.subr.bf16.mxu0 %v599
  %777 = vmatpush1.bf16.msra.mxu0 %v598
  %778 = vmatprep.subr.bf16.mxu0 %v603
  %779 = vmatpush1.bf16.msra.mxu0 %v602
  %780 = vmatprep.subr.bf16.mxu0 %v607
  %781 = vmatpush1.bf16.msra.mxu0 %v606
  %782 = vmatprep.subr.bf16.mxu0 %v611
  %783 = vmatpush1.bf16.msra.mxu0 %v610
  %784 = vmatprep.subr.bf16.mxu0 %v615
  %785 = vmatpush1.bf16.msra.mxu0 %v614
  %786 = vmatprep.subr.bf16.mxu0 %v619
  %787 = vmatpush1.bf16.msra.mxu0 %v618
  %788 = vmatprep.subr.bf16.mxu0 %v623
  %789 = vmatpush1.bf16.msra.mxu0 %v622
  %790 = vmatprep.subr.bf16.mxu0 0
  %791 = vmatpush1.bf16.msra.mxu0 0
  %792 = vmatprep.subr.bf16.mxu0 0
  %793 = vmatpush1.bf16.msra.mxu0 0
  %794 = vmatprep.subr.bf16.mxu0 0
  %795 = vmatpush1.bf16.msra.mxu0 0
  %796 = vmatprep.subr.bf16.mxu0 0
  %797 = vmatpush1.bf16.msra.mxu0 0
  %798 = vmatprep.subr.bf16.mxu0 0
  %799 = vmatpush1.bf16.msra.mxu0 0
  %800 = vmatprep.subr.bf16.mxu0 0
  %801 = vmatpush1.bf16.msra.mxu0 0
  %802 = vmatprep.subr.bf16.mxu0 0
  %803 = vmatpush1.bf16.msra.mxu0 0
  %804 = vmatprep.subr.bf16.mxu0 0
  %805 = vmatpush1.bf16.msra.mxu0 0
  %806 = vmatprep.mubr.bf16.mxu0 0
  %807 = vmatmul.mubr.bf16.gmra.mrb[0].mxu0 %v768
  %v808 = vpop.f32.mrb[0].mxu0
  %v809 = vadd.f32 0.0, %v808
  %v810 = vpop.f32.mrb[0].mxu0
  %v811 = vadd.f32 0.0, %v810
  %v812 = vpop.f32.mrb[0].mxu0
  %v813 = vpop.f32.mrb[0].mxu0
  %814 = vdwg.mxu0
  %815 = vmatprep.subr.bf16.mxu0 %v597
  %816 = vmatpush1.bf16.msra.mxu0 %v596
  %817 = vmatprep.subr.bf16.mxu0 %v601
  %818 = vmatpush1.bf16.msra.mxu0 %v600
  %819 = vmatprep.subr.bf16.mxu0 %v605
  %820 = vmatpush1.bf16.msra.mxu0 %v604
  %821 = vmatprep.subr.bf16.mxu0 %v609
  %822 = vmatpush1.bf16.msra.mxu0 %v608
  %823 = vmatprep.subr.bf16.mxu0 %v613
  %824 = vmatpush1.bf16.msra.mxu0 %v612
  %825 = vmatprep.subr.bf16.mxu0 %v617
  %826 = vmatpush1.bf16.msra.mxu0 %v616
  %827 = vmatprep.subr.bf16.mxu0 %v621
  %828 = vmatpush1.bf16.msra.mxu0 %v620
  %829 = vmatprep.subr.bf16.mxu0 %v625
  %830 = vmatpush1.bf16.msra.mxu0 %v624
  %831 = vmatprep.subr.bf16.mxu0 0
  %832 = vmatpush1.bf16.msra.mxu0 0
  %833 = vmatprep.subr.bf16.mxu0 0
  %834 = vmatpush1.bf16.msra.mxu0 0
  %835 = vmatprep.subr.bf16.mxu0 0
  %836 = vmatpush1.bf16.msra.mxu0 0
  %837 = vmatprep.subr.bf16.mxu0 0
  %838 = vmatpush1.bf16.msra.mxu0 0
  %839 = vmatprep.subr.bf16.mxu0 0
  %840 = vmatpush1.bf16.msra.mxu0 0
  %841 = vmatprep.subr.bf16.mxu0 0
  %842 = vmatpush1.bf16.msra.mxu0 0
  %843 = vmatprep.subr.bf16.mxu0 0
  %844 = vmatpush1.bf16.msra.mxu0 0
  %845 = vmatprep.subr.bf16.mxu0 0
  %846 = vmatpush1.bf16.msra.mxu0 0
  %847 = vmatprep.mubr.bf16.mxu0 0
  %848 = vmatmul.mubr.bf16.gmra.mrb[0].mxu0 %v768
  %v849 = vpop.f32.mrb[0].mxu0
  %v850 = vadd.f32 0.0, %v849
  %v851 = vpop.f32.mrb[0].mxu0
  %v852 = vadd.f32 0.0, %v851
  %v853 = vpop.f32.mrb[0].mxu0
  %v854 = vpop.f32.mrb[0].mxu0
  %855 = vdwg.mxu0
  %v856 = vadd.f32 %v770, %v809
  %v857 = vadd.f32 %v771, %v811
  %v858 = vadd.f32 %v772, %v850
  %v859 = vadd.f32 %v773, %v852
  %v860 = vxor.u32 %v856, 2147483648
  %v861 = vmul.f32 %v860, 1.442695
  %v862 = vpow.pop %v861
  %v863 = vadd.f32 %v862, 1.0
  %v864 = vrcp.pop %v863
  %v865 = vmul.f32 1.0, %v864
  %v866 = vxor.u32 %v857, 2147483648
  %v867 = vmul.f32 %v866, 1.442695
  %v868 = vpow.pop %v867
  %v869 = vadd.f32 %v868, 1.0
  %v870 = vrcp.pop %v869
  %v871 = vmul.f32 1.0, %v870
  %v872 = vtanh.pop %v858
  %v873 = vxor.u32 %v859, 2147483648
  %v874 = vmul.f32 %v873, 1.442695
  %v875 = vpow.pop %v874
  %v876 = vadd.f32 %v875, 1.0
  %v877 = vrcp.pop %v876
  %v878 = vmul.f32 1.0, %v877
  %v879 = vmul.f32 %v871, %v765
  %v880 = vmul.f32 %v865, %v872
  %v881 = vadd.f32 %v879, %v880
  %v882 = vtanh.pop %v881
  %v883 = vmul.f32 %v878, %v882
  %v884 = vpack.c.bf16 %v883, %v883
  %s885 = scalar_lea.vmem [#allocation4], 64
  %v886 = vld [vmem:[%s885] sm:$0xff]
  %v887 = vld [vmem:[%s885 + $0x8] sm:$0xff]
  %v888 = vld [vmem:[%s885 + $0x10] sm:$0xff]
  %v889 = vld [vmem:[%s885 + $0x18] sm:$0xff]
  %890 = vmatprep.subr.bf16.mxu0 %v595
  %891 = vmatpush1.bf16.msra.mxu0 %v594
  %892 = vmatprep.subr.bf16.mxu0 %v599
  %893 = vmatpush1.bf16.msra.mxu0 %v598
  %894 = vmatprep.subr.bf16.mxu0 %v603
  %895 = vmatpush1.bf16.msra.mxu0 %v602
  %896 = vmatprep.subr.bf16.mxu0 %v607
  %897 = vmatpush1.bf16.msra.mxu0 %v606
  %898 = vmatprep.subr.bf16.mxu0 %v611
  %899 = vmatpush1.bf16.msra.mxu0 %v610
  %900 = vmatprep.subr.bf16.mxu0 %v615
  %901 = vmatpush1.bf16.msra.mxu0 %v614
  %902 = vmatprep.subr.bf16.mxu0 %v619
  %903 = vmatpush1.bf16.msra.mxu0 %v618
  %904 = vmatprep.subr.bf16.mxu0 %v623
  %905 = vmatpush1.bf16.msra.mxu0 %v622
  %906 = vmatprep.subr.bf16.mxu0 0
  %907 = vmatpush1.bf16.msra.mxu0 0
  %908 = vmatprep.subr.bf16.mxu0 0
  %909 = vmatpush1.bf16.msra.mxu0 0
  %910 = vmatprep.subr.bf16.mxu0 0
  %911 = vmatpush1.bf16.msra.mxu0 0
  %912 = vmatprep.subr.bf16.mxu0 0
  %913 = vmatpush1.bf16.msra.mxu0 0
  %914 = vmatprep.subr.bf16.mxu0 0
  %915 = vmatpush1.bf16.msra.mxu0 0
  %916 = vmatprep.subr.bf16.mxu0 0
  %917 = vmatpush1.bf16.msra.mxu0 0
  %918 = vmatprep.subr.bf16.mxu0 0
  %919 = vmatpush1.bf16.msra.mxu0 0
  %920 = vmatprep.subr.bf16.mxu0 0
  %921 = vmatpush1.bf16.msra.mxu0 0
  %922 = vmatprep.mubr.bf16.mxu0 0
  %923 = vmatmul.mubr.bf16.gmra.mrb[0].mxu0 %v884
  %v924 = vpop.f32.mrb[0].mxu0
  %v925 = vadd.f32 0.0, %v924
  %v926 = vpop.f32.mrb[0].mxu0
  %v927 = vadd.f32 0.0, %v926
  %v928 = vpop.f32.mrb[0].mxu0
  %v929 = vpop.f32.mrb[0].mxu0
  %930 = vdwg.mxu0
  %931 = vmatprep.subr.bf16.mxu0 %v597
  %932 = vmatpush1.bf16.msra.mxu0 %v596
  %933 = vmatprep.subr.bf16.mxu0 %v601
  %934 = vmatpush1.bf16.msra.mxu0 %v600
  %935 = vmatprep.subr.bf16.mxu0 %v605
  %936 = vmatpush1.bf16.msra.mxu0 %v604
  %937 = vmatprep.subr.bf16.mxu0 %v609
  %938 = vmatpush1.bf16.msra.mxu0 %v608
  %939 = vmatprep.subr.bf16.mxu0 %v613
  %940 = vmatpush1.bf16.msra.mxu0 %v612
  %941 = vmatprep.subr.bf16.mxu0 %v617
  %942 = vmatpush1.bf16.msra.mxu0 %v616
  %943 = vmatprep.subr.bf16.mxu0 %v621
  %944 = vmatpush1.bf16.msra.mxu0 %v620
  %945 = vmatprep.subr.bf16.mxu0 %v625
  %946 = vmatpush1.bf16.msra.mxu0 %v624
  %947 = vmatprep.subr.bf16.mxu0 0
  %948 = vmatpush1.bf16.msra.mxu0 0
  %949 = vmatprep.subr.bf16.mxu0 0
  %950 = vmatpush1.bf16.msra.mxu0 0
  %951 = vmatprep.subr.bf16.mxu0 0
  %952 = vmatpush1.bf16.msra.mxu0 0
  %953 = vmatprep.subr.bf16.mxu0 0
  %954 = vmatpush1.bf16.msra.mxu0 0
  %955 = vmatprep.subr.bf16.mxu0 0
  %956 = vmatpush1.bf16.msra.mxu0 0
  %957 = vmatprep.subr.bf16.mxu0 0
  %958 = vmatpush1.bf16.msra.mxu0 0
  %959 = vmatprep.subr.bf16.mxu0 0
  %960 = vmatpush1.bf16.msra.mxu0 0
  %961 = vmatprep.subr.bf16.mxu0 0
  %962 = vmatpush1.bf16.msra.mxu0 0
  %963 = vmatprep.mubr.bf16.mxu0 0
  %964 = vmatmul.mubr.bf16.gmra.mrb[0].mxu0 %v884
  %v965 = vpop.f32.mrb[0].mxu0
  %v966 = vadd.f32 0.0, %v965
  %v967 = vpop.f32.mrb[0].mxu0
  %v968 = vadd.f32 0.0, %v967
  %v969 = vpop.f32.mrb[0].mxu0
  %v970 = vpop.f32.mrb[0].mxu0
  %971 = vdwg.mxu0
  %v972 = vadd.f32 %v886, %v925
  %v973 = vadd.f32 %v887, %v927
  %v974 = vadd.f32 %v888, %v966
  %v975 = vadd.f32 %v889, %v968
  %v976 = vxor.u32 %v972, 2147483648
  %v977 = vmul.f32 %v976, 1.442695
  %v978 = vpow.pop %v977
  %v979 = vadd.f32 %v978, 1.0
  %v980 = vrcp.pop %v979
  %v981 = vmul.f32 1.0, %v980
  %v982 = vxor.u32 %v973, 2147483648
  %v983 = vmul.f32 %v982, 1.442695
  %v984 = vpow.pop %v983
  %v985 = vadd.f32 %v984, 1.0
  %v986 = vrcp.pop %v985
  %v987 = vmul.f32 1.0, %v986
  %v988 = vtanh.pop %v974
  %v989 = vxor.u32 %v975, 2147483648
  %v990 = vmul.f32 %v989, 1.442695
  %v991 = vpow.pop %v990
  %v992 = vadd.f32 %v991, 1.0
  %v993 = vrcp.pop %v992
  %v994 = vmul.f32 1.0, %v993
  %v995 = vmul.f32 %v987, %v881
  %v996 = vmul.f32 %v981, %v988
  %v997 = vadd.f32 %v995, %v996
  %v998 = vtanh.pop %v997
  %v999 = vmul.f32 %v994, %v998
  %v1000 = vpack.c.bf16 %v999, %v999
  %s1001 = scalar_lea.vmem [#allocation4], 96
  %v1002 = vld [vmem:[%s1001] sm:$0xff]
  %v1003 = vld [vmem:[%s1001 + $0x8] sm:$0xff]
  %v1004 = vld [vmem:[%s1001 + $0x10] sm:$0xff]
  %v1005 = vld [vmem:[%s1001 + $0x18] sm:$0xff]
  %1006 = vmatprep.subr.bf16.mxu0 %v595
  %1007 = vmatpush1.bf16.msra.mxu0 %v594
  %1008 = vmatprep.subr.bf16.mxu0 %v599
  %1009 = vmatpush1.bf16.msra.mxu0 %v598
  %1010 = vmatprep.subr.bf16.mxu0 %v603
  %1011 = vmatpush1.bf16.msra.mxu0 %v602
  %1012 = vmatprep.subr.bf16.mxu0 %v607
  %1013 = vmatpush1.bf16.msra.mxu0 %v606
  %1014 = vmatprep.subr.bf16.mxu0 %v611
  %1015 = vmatpush1.bf16.msra.mxu0 %v610
  %1016 = vmatprep.subr.bf16.mxu0 %v615
  %1017 = vmatpush1.bf16.msra.mxu0 %v614
  %1018 = vmatprep.subr.bf16.mxu0 %v619
  %1019 = vmatpush1.bf16.msra.mxu0 %v618
  %1020 = vmatprep.subr.bf16.mxu0 %v623
  %1021 = vmatpush1.bf16.msra.mxu0 %v622
  %1022 = vmatprep.subr.bf16.mxu0 0
  %1023 = vmatpush1.bf16.msra.mxu0 0
  %1024 = vmatprep.subr.bf16.mxu0 0
  %1025 = vmatpush1.bf16.msra.mxu0 0
  %1026 = vmatprep.subr.bf16.mxu0 0
  %1027 = vmatpush1.bf16.msra.mxu0 0
  %1028 = vmatprep.subr.bf16.mxu0 0
  %1029 = vmatpush1.bf16.msra.mxu0 0
  %1030 = vmatprep.subr.bf16.mxu0 0
  %1031 = vmatpush1.bf16.msra.mxu0 0
  %1032 = vmatprep.subr.bf16.mxu0 0
  %1033 = vmatpush1.bf16.msra.mxu0 0
  %1034 = vmatprep.subr.bf16.mxu0 0
  %1035 = vmatpush1.bf16.msra.mxu0 0
  %1036 = vmatprep.subr.bf16.mxu0 0
  %1037 = vmatpush1.bf16.msra.mxu0 0
  %1038 = vmatprep.mubr.bf16.mxu0 0
  %1039 = vmatmul.mubr.bf16.gmra.mrb[0].mxu0 %v1000
  %v1040 = vpop.f32.mrb[0].mxu0
  %v1041 = vadd.f32 0.0, %v1040
  %v1042 = vpop.f32.mrb[0].mxu0
  %v1043 = vadd.f32 0.0, %v1042
  %v1044 = vpop.f32.mrb[0].mxu0
  %v1045 = vpop.f32.mrb[0].mxu0
  %1046 = vdwg.mxu0
  %1047 = vmatprep.subr.bf16.mxu0 %v597
  %1048 = vmatpush1.bf16.msra.mxu0 %v596
  %1049 = vmatprep.subr.bf16.mxu0 %v601
  %1050 = vmatpush1.bf16.msra.mxu0 %v600
  %1051 = vmatprep.subr.bf16.mxu0 %v605
  %1052 = vmatpush1.bf16.msra.mxu0 %v604
  %1053 = vmatprep.subr.bf16.mxu0 %v609
  %1054 = vmatpush1.bf16.msra.mxu0 %v608
  %1055 = vmatprep.subr.bf16.mxu0 %v613
  %1056 = vmatpush1.bf16.msra.mxu0 %v612
  %1057 = vmatprep.subr.bf16.mxu0 %v617
  %1058 = vmatpush1.bf16.msra.mxu0 %v616
  %1059 = vmatprep.subr.bf16.mxu0 %v621
  %1060 = vmatpush1.bf16.msra.mxu0 %v620
  %1061 = vmatprep.subr.bf16.mxu0 %v625
  %1062 = vmatpush1.bf16.msra.mxu0 %v624
  %1063 = vmatprep.subr.bf16.mxu0 0
  %1064 = vmatpush1.bf16.msra.mxu0 0
  %1065 = vmatprep.subr.bf16.mxu0 0
  %1066 = vmatpush1.bf16.msra.mxu0 0
  %1067 = vmatprep.subr.bf16.mxu0 0
  %1068 = vmatpush1.bf16.msra.mxu0 0
  %1069 = vmatprep.subr.bf16.mxu0 0
  %1070 = vmatpush1.bf16.msra.mxu0 0
  %1071 = vmatprep.subr.bf16.mxu0 0
  %1072 = vmatpush1.bf16.msra.mxu0 0
  %1073 = vmatprep.subr.bf16.mxu0 0
  %1074 = vmatpush1.bf16.msra.mxu0 0
  %1075 = vmatprep.subr.bf16.mxu0 0
  %1076 = vmatpush1.bf16.msra.mxu0 0
  %1077 = vmatprep.subr.bf16.mxu0 0
  %1078 = vmatpush1.bf16.msra.mxu0 0
  %1079 = vmatprep.mubr.bf16.mxu0 0
  %1080 = vmatmul.mubr.bf16.gmra.mrb[0].mxu0 %v1000
  %v1081 = vpop.f32.mrb[0].mxu0
  %v1082 = vadd.f32 0.0, %v1081
  %v1083 = vpop.f32.mrb[0].mxu0
  %v1084 = vadd.f32 0.0, %v1083
  %v1085 = vpop.f32.mrb[0].mxu0
  %v1086 = vpop.f32.mrb[0].mxu0
  %1087 = vdwg.mxu0
  %v1088 = vadd.f32 %v1002, %v1041
  %v1089 = vadd.f32 %v1003, %v1043
  %v1090 = vadd.f32 %v1004, %v1082
  %v1091 = vadd.f32 %v1005, %v1084
  %v1092 = vxor.u32 %v1088, 2147483648
  %v1093 = vmul.f32 %v1092, 1.442695
  %v1094 = vpow.pop %v1093
  %v1095 = vadd.f32 %v1094, 1.0
  %v1096 = vrcp.pop %v1095
  %v1097 = vmul.f32 1.0, %v1096
  %v1098 = vxor.u32 %v1089, 2147483648
  %v1099 = vmul.f32 %v1098, 1.442695
  %v1100 = vpow.pop %v1099
  %v1101 = vadd.f32 %v1100, 1.0
  %v1102 = vrcp.pop %v1101
  %v1103 = vmul.f32 1.0, %v1102
  %v1104 = vtanh.pop %v1090
  %v1105 = vxor.u32 %v1091, 2147483648
  %v1106 = vmul.f32 %v1105, 1.442695
  %v1107 = vpow.pop %v1106
  %v1108 = vadd.f32 %v1107, 1.0
  %v1109 = vrcp.pop %v1108
  %v1110 = vmul.f32 1.0, %v1109
  %v1111 = vmul.f32 %v1103, %v997
  %v1112 = vmul.f32 %v1097, %v1104
  %v1113 = vadd.f32 %v1111, %v1112
  %v1114 = vtanh.pop %v1113
  %v1115 = vmul.f32 %v1110, %v1114
  %v1116 = vpack.c.bf16 %v1115, %v1115
  %s1117 = scalar_lea.vmem [#allocation4], 128
  %v1118 = vld [vmem:[%s1117] sm:$0xff]
  %v1119 = vld [vmem:[%s1117 + $0x8] sm:$0xff]
  %v1120 = vld [vmem:[%s1117 + $0x10] sm:$0xff]
  %v1121 = vld [vmem:[%s1117 + $0x18] sm:$0xff]
  %1122 = vmatprep.subr.bf16.mxu0 %v595
  %1123 = vmatpush1.bf16.msra.mxu0 %v594
  %1124 = vmatprep.subr.bf16.mxu0 %v599
  %1125 = vmatpush1.bf16.msra.mxu0 %v598
  %1126 = vmatprep.subr.bf16.mxu0 %v603
  %1127 = vmatpush1.bf16.msra.mxu0 %v602
  %1128 = vmatprep.subr.bf16.mxu0 %v607
  %1129 = vmatpush1.bf16.msra.mxu0 %v606
  %1130 = vmatprep.subr.bf16.mxu0 %v611
  %1131 = vmatpush1.bf16.msra.mxu0 %v610
  %1132 = vmatprep.subr.bf16.mxu0 %v615
  %1133 = vmatpush1.bf16.msra.mxu0 %v614
  %1134 = vmatprep.subr.bf16.mxu0 %v619
  %1135 = vmatpush1.bf16.msra.mxu0 %v618
  %1136 = vmatprep.subr.bf16.mxu0 %v623
  %1137 = vmatpush1.bf16.msra.mxu0 %v622
  %1138 = vmatprep.subr.bf16.mxu0 0
  %1139 = vmatpush1.bf16.msra.mxu0 0
  %1140 = vmatprep.subr.bf16.mxu0 0
  %1141 = vmatpush1.bf16.msra.mxu0 0
  %1142 = vmatprep.subr.bf16.mxu0 0
  %1143 = vmatpush1.bf16.msra.mxu0 0
  %1144 = vmatprep.subr.bf16.mxu0 0
  %1145 = vmatpush1.bf16.msra.mxu0 0
  %1146 = vmatprep.subr.bf16.mxu0 0
  %1147 = vmatpush1.bf16.msra.mxu0 0
  %1148 = vmatprep.subr.bf16.mxu0 0
  %1149 = vmatpush1.bf16.msra.mxu0 0
  %1150 = vmatprep.subr.bf16.mxu0 0
  %1151 = vmatpush1.bf16.msra.mxu0 0
  %1152 = vmatprep.subr.bf16.mxu0 0
  %1153 = vmatpush1.bf16.msra.mxu0 0
  %1154 = vmatprep.mubr.bf16.mxu0 0
  %1155 = vmatmul.mubr.bf16.gmra.mrb[0].mxu0 %v1116
  %v1156 = vpop.f32.mrb[0].mxu0
  %v1157 = vadd.f32 0.0, %v1156
  %v1158 = vpop.f32.mrb[0].mxu0
  %v1159 = vadd.f32 0.0, %v1158
  %v1160 = vpop.f32.mrb[0].mxu0
  %v1161 = vpop.f32.mrb[0].mxu0
  %1162 = vdwg.mxu0
  %1163 = vmatprep.subr.bf16.mxu0 %v597
  %1164 = vmatpush1.bf16.msra.mxu0 %v596
  %1165 = vmatprep.subr.bf16.mxu0 %v601
  %1166 = vmatpush1.bf16.msra.mxu0 %v600
  %1167 = vmatprep.subr.bf16.mxu0 %v605
  %1168 = vmatpush1.bf16.msra.mxu0 %v604
  %1169 = vmatprep.subr.bf16.mxu0 %v609
  %1170 = vmatpush1.bf16.msra.mxu0 %v608
  %1171 = vmatprep.subr.bf16.mxu0 %v613
  %1172 = vmatpush1.bf16.msra.mxu0 %v612
  %1173 = vmatprep.subr.bf16.mxu0 %v617
  %1174 = vmatpush1.bf16.msra.mxu0 %v616
  %1175 = vmatprep.subr.bf16.mxu0 %v621
  %1176 = vmatpush1.bf16.msra.mxu0 %v620
  %1177 = vmatprep.subr.bf16.mxu0 %v625
  %1178 = vmatpush1.bf16.msra.mxu0 %v624
  %1179 = vmatprep.subr.bf16.mxu0 0
  %1180 = vmatpush1.bf16.msra.mxu0 0
  %1181 = vmatprep.subr.bf16.mxu0 0
  %1182 = vmatpush1.bf16.msra.mxu0 0
  %1183 = vmatprep.subr.bf16.mxu0 0
  %1184 = vmatpush1.bf16.msra.mxu0 0
  %1185 = vmatprep.subr.bf16.mxu0 0
  %1186 = vmatpush1.bf16.msra.mxu0 0
  %1187 = vmatprep.subr.bf16.mxu0 0
  %1188 = vmatpush1.bf16.msra.mxu0 0
  %1189 = vmatprep.subr.bf16.mxu0 0
  %1190 = vmatpush1.bf16.msra.mxu0 0
  %1191 = vmatprep.subr.bf16.mxu0 0
  %1192 = vmatpush1.bf16.msra.mxu0 0
  %1193 = vmatprep.subr.bf16.mxu0 0
  %1194 = vmatpush1.bf16.msra.mxu0 0
  %1195 = vmatprep.mubr.bf16.mxu0 0
  %1196 = vmatmul.mubr.bf16.gmra.mrb[0].mxu0 %v1116
  %v1197 = vpop.f32.mrb[0].mxu0
  %v1198 = vadd.f32 0.0, %v1197
  %v1199 = vpop.f32.mrb[0].mxu0
  %v1200 = vadd.f32 0.0, %v1199
  %v1201 = vpop.f32.mrb[0].mxu0
  %v1202 = vpop.f32.mrb[0].mxu0
  %1203 = vdwg.mxu0
  %v1204 = vadd.f32 %v1118, %v1157
  %v1205 = vadd.f32 %v1119, %v1159
  %v1206 = vadd.f32 %v1120, %v1198
  %v1207 = vadd.f32 %v1121, %v1200
  %v1208 = vxor.u32 %v1204, 2147483648
  %v1209 = vmul.f32 %v1208, 1.442695
  %v1210 = vpow.pop %v1209
  %v1211 = vadd.f32 %v1210, 1.0
  %v1212 = vrcp.pop %v1211
  %v1213 = vmul.f32 1.0, %v1212
  %v1214 = vxor.u32 %v1205, 2147483648
  %v1215 = vmul.f32 %v1214, 1.442695
  %v1216 = vpow.pop %v1215
  %v1217 = vadd.f32 %v1216, 1.0
  %v1218 = vrcp.pop %v1217
  %v1219 = vmul.f32 1.0, %v1218
  %v1220 = vtanh.pop %v1206
  %v1221 = vxor.u32 %v1207, 2147483648
  %v1222 = vmul.f32 %v1221, 1.442695
  %v1223 = vpow.pop %v1222
  %v1224 = vadd.f32 %v1223, 1.0
  %v1225 = vrcp.pop %v1224
  %v1226 = vmul.f32 1.0, %v1225
  %v1227 = vmul.f32 %v1219, %v1113
  %v1228 = vmul.f32 %v1213, %v1220
  %v1229 = vadd.f32 %v1227, %v1228
  %v1230 = vtanh.pop %v1229
  %v1231 = vmul.f32 %v1226, %v1230
  %v1232 = vpack.c.bf16 %v1231, %v1231
  %s1233 = scalar_lea.vmem [#allocation4], 160
  %v1234 = vld [vmem:[%s1233] sm:$0xff]
  %v1235 = vld [vmem:[%s1233 + $0x8] sm:$0xff]
  %v1236 = vld [vmem:[%s1233 + $0x10] sm:$0xff]
  %v1237 = vld [vmem:[%s1233 + $0x18] sm:$0xff]
  %1238 = vmatprep.subr.bf16.mxu0 %v595
  %1239 = vmatpush1.bf16.msra.mxu0 %v594
  %1240 = vmatprep.subr.bf16.mxu0 %v599
  %1241 = vmatpush1.bf16.msra.mxu0 %v598
  %1242 = vmatprep.subr.bf16.mxu0 %v603
  %1243 = vmatpush1.bf16.msra.mxu0 %v602
  %1244 = vmatprep.subr.bf16.mxu0 %v607
  %1245 = vmatpush1.bf16.msra.mxu0 %v606
  %1246 = vmatprep.subr.bf16.mxu0 %v611
  %1247 = vmatpush1.bf16.msra.mxu0 %v610
  %1248 = vmatprep.subr.bf16.mxu0 %v615
  %1249 = vmatpush1.bf16.msra.mxu0 %v614
  %1250 = vmatprep.subr.bf16.mxu0 %v619
  %1251 = vmatpush1.bf16.msra.mxu0 %v618
  %1252 = vmatprep.subr.bf16.mxu0 %v623
  %1253 = vmatpush1.bf16.msra.mxu0 %v622
  %1254 = vmatprep.subr.bf16.mxu0 0
  %1255 = vmatpush1.bf16.msra.mxu0 0
  %1256 = vmatprep.subr.bf16.mxu0 0
  %1257 = vmatpush1.bf16.msra.mxu0 0
  %1258 = vmatprep.subr.bf16.mxu0 0
  %1259 = vmatpush1.bf16.msra.mxu0 0
  %1260 = vmatprep.subr.bf16.mxu0 0
  %1261 = vmatpush1.bf16.msra.mxu0 0
  %1262 = vmatprep.subr.bf16.mxu0 0
  %1263 = vmatpush1.bf16.msra.mxu0 0
  %1264 = vmatprep.subr.bf16.mxu0 0
  %1265 = vmatpush1.bf16.msra.mxu0 0
  %1266 = vmatprep.subr.bf16.mxu0 0
  %1267 = vmatpush1.bf16.msra.mxu0 0
  %1268 = vmatprep.subr.bf16.mxu0 0
  %1269 = vmatpush1.bf16.msra.mxu0 0
  %1270 = vmatprep.mubr.bf16.mxu0 0
  %1271 = vmatmul.mubr.bf16.gmra.mrb[0].mxu0 %v1232
  %v1272 = vpop.f32.mrb[0].mxu0
  %v1273 = vadd.f32 0.0, %v1272
  %v1274 = vpop.f32.mrb[0].mxu0
  %v1275 = vadd.f32 0.0, %v1274
  %v1276 = vpop.f32.mrb[0].mxu0
  %v1277 = vpop.f32.mrb[0].mxu0
  %1278 = vdwg.mxu0
  %1279 = vmatprep.subr.bf16.mxu0 %v597
  %1280 = vmatpush1.bf16.msra.mxu0 %v596
  %1281 = vmatprep.subr.bf16.mxu0 %v601
  %1282 = vmatpush1.bf16.msra.mxu0 %v600
  %1283 = vmatprep.subr.bf16.mxu0 %v605
  %1284 = vmatpush1.bf16.msra.mxu0 %v604
  %1285 = vmatprep.subr.bf16.mxu0 %v609
  %1286 = vmatpush1.bf16.msra.mxu0 %v608
  %1287 = vmatprep.subr.bf16.mxu0 %v613
  %1288 = vmatpush1.bf16.msra.mxu0 %v612
  %1289 = vmatprep.subr.bf16.mxu0 %v617
  %1290 = vmatpush1.bf16.msra.mxu0 %v616
  %1291 = vmatprep.subr.bf16.mxu0 %v621
  %1292 = vmatpush1.bf16.msra.mxu0 %v620
  %1293 = vmatprep.subr.bf16.mxu0 %v625
  %1294 = vmatpush1.bf16.msra.mxu0 %v624
  %1295 = vmatprep.subr.bf16.mxu0 0
  %1296 = vmatpush1.bf16.msra.mxu0 0
  %1297 = vmatprep.subr.bf16.mxu0 0
  %1298 = vmatpush1.bf16.msra.mxu0 0
  %1299 = vmatprep.subr.bf16.mxu0 0
  %1300 = vmatpush1.bf16.msra.mxu0 0
  %1301 = vmatprep.subr.bf16.mxu0 0
  %1302 = vmatpush1.bf16.msra.mxu0 0
  %1303 = vmatprep.subr.bf16.mxu0 0
  %1304 = vmatpush1.bf16.msra.mxu0 0
  %1305 = vmatprep.subr.bf16.mxu0 0
  %1306 = vmatpush1.bf16.msra.mxu0 0
  %1307 = vmatprep.subr.bf16.mxu0 0
  %1308 = vmatpush1.bf16.msra.mxu0 0
  %1309 = vmatprep.subr.bf16.mxu0 0
  %1310 = vmatpush1.bf16.msra.mxu0 0
  %1311 = vmatprep.mubr.bf16.mxu0 0
  %1312 = vmatmul.mubr.bf16.gmra.mrb[0].mxu0 %v1232
  %v1313 = vpop.f32.mrb[0].mxu0
  %v1314 = vadd.f32 0.0, %v1313
  %v1315 = vpop.f32.mrb[0].mxu0
  %v1316 = vadd.f32 0.0, %v1315
  %v1317 = vpop.f32.mrb[0].mxu0
  %v1318 = vpop.f32.mrb[0].mxu0
  %1319 = vdwg.mxu0
  %v1320 = vadd.f32 %v1234, %v1273
  %v1321 = vadd.f32 %v1235, %v1275
  %v1322 = vadd.f32 %v1236, %v1314
  %v1323 = vadd.f32 %v1237, %v1316
  %v1324 = vxor.u32 %v1320, 2147483648
  %v1325 = vmul.f32 %v1324, 1.442695
  %v1326 = vpow.pop %v1325
  %v1327 = vadd.f32 %v1326, 1.0
  %v1328 = vrcp.pop %v1327
  %v1329 = vmul.f32 1.0, %v1328
  %v1330 = vxor.u32 %v1321, 2147483648
  %v1331 = vmul.f32 %v1330, 1.442695
  %v1332 = vpow.pop %v1331
  %v1333 = vadd.f32 %v1332, 1.0
  %v1334 = vrcp.pop %v1333
  %v1335 = vmul.f32 1.0, %v1334
  %v1336 = vtanh.pop %v1322
  %v1337 = vxor.u32 %v1323, 2147483648
  %v1338 = vmul.f32 %v1337, 1.442695
  %v1339 = vpow.pop %v1338
  %v1340 = vadd.f32 %v1339, 1.0
  %v1341 = vrcp.pop %v1340
  %v1342 = vmul.f32 1.0, %v1341
  %v1343 = vmul.f32 %v1335, %v1229
  %v1344 = vmul.f32 %v1329, %v1336
  %v1345 = vadd.f32 %v1343, %v1344
  %v1346 = vtanh.pop %v1345
  %v1347 = vmul.f32 %v1342, %v1346
  %v1348 = vpack.c.bf16 %v1347, %v1347
  %s1349 = scalar_lea.vmem [#allocation4], 192
  %v1350 = vld [vmem:[%s1349] sm:$0xff]
  %v1351 = vld [vmem:[%s1349 + $0x8] sm:$0xff]
  %v1352 = vld [vmem:[%s1349 + $0x10] sm:$0xff]
  %v1353 = vld [vmem:[%s1349 + $0x18] sm:$0xff]
  %1354 = vmatprep.subr.bf16.mxu0 %v595
  %1355 = vmatpush1.bf16.msra.mxu0 %v594
  %1356 = vmatprep.subr.bf16.mxu0 %v599
  %1357 = vmatpush1.bf16.msra.mxu0 %v598
  %1358 = vmatprep.subr.bf16.mxu0 %v603
  %1359 = vmatpush1.bf16.msra.mxu0 %v602
  %1360 = vmatprep.subr.bf16.mxu0 %v607
  %1361 = vmatpush1.bf16.msra.mxu0 %v606
  %1362 = vmatprep.subr.bf16.mxu0 %v611
  %1363 = vmatpush1.bf16.msra.mxu0 %v610
  %1364 = vmatprep.subr.bf16.mxu0 %v615
  %1365 = vmatpush1.bf16.msra.mxu0 %v614
  %1366 = vmatprep.subr.bf16.mxu0 %v619
  %1367 = vmatpush1.bf16.msra.mxu0 %v618
  %1368 = vmatprep.subr.bf16.mxu0 %v623
  %1369 = vmatpush1.bf16.msra.mxu0 %v622
  %1370 = vmatprep.subr.bf16.mxu0 0
  %1371 = vmatpush1.bf16.msra.mxu0 0
  %1372 = vmatprep.subr.bf16.mxu0 0
  %1373 = vmatpush1.bf16.msra.mxu0 0
  %1374 = vmatprep.subr.bf16.mxu0 0
  %1375 = vmatpush1.bf16.msra.mxu0 0
  %1376 = vmatprep.subr.bf16.mxu0 0
  %1377 = vmatpush1.bf16.msra.mxu0 0
  %1378 = vmatprep.subr.bf16.mxu0 0
  %1379 = vmatpush1.bf16.msra.mxu0 0
  %1380 = vmatprep.subr.bf16.mxu0 0
  %1381 = vmatpush1.bf16.msra.mxu0 0
  %1382 = vmatprep.subr.bf16.mxu0 0
  %1383 = vmatpush1.bf16.msra.mxu0 0
  %1384 = vmatprep.subr.bf16.mxu0 0
  %1385 = vmatpush1.bf16.msra.mxu0 0
  %1386 = vmatprep.mubr.bf16.mxu0 0
  %1387 = vmatmul.mubr.bf16.gmra.mrb[0].mxu0 %v1348
  %v1388 = vpop.f32.mrb[0].mxu0
  %v1389 = vadd.f32 0.0, %v1388
  %v1390 = vpop.f32.mrb[0].mxu0
  %v1391 = vadd.f32 0.0, %v1390
  %v1392 = vpop.f32.mrb[0].mxu0
  %v1393 = vpop.f32.mrb[0].mxu0
  %1394 = vdwg.mxu0
  %1395 = vmatprep.subr.bf16.mxu0 %v597
  %1396 = vmatpush1.bf16.msra.mxu0 %v596
  %1397 = vmatprep.subr.bf16.mxu0 %v601
  %1398 = vmatpush1.bf16.msra.mxu0 %v600
  %1399 = vmatprep.subr.bf16.mxu0 %v605
  %1400 = vmatpush1.bf16.msra.mxu0 %v604
  %1401 = vmatprep.subr.bf16.mxu0 %v609
  %1402 = vmatpush1.bf16.msra.mxu0 %v608
  %1403 = vmatprep.subr.bf16.mxu0 %v613
  %1404 = vmatpush1.bf16.msra.mxu0 %v612
  %1405 = vmatprep.subr.bf16.mxu0 %v617
  %1406 = vmatpush1.bf16.msra.mxu0 %v616
  %1407 = vmatprep.subr.bf16.mxu0 %v621
  %1408 = vmatpush1.bf16.msra.mxu0 %v620
  %1409 = vmatprep.subr.bf16.mxu0 %v625
  %1410 = vmatpush1.bf16.msra.mxu0 %v624
  %1411 = vmatprep.subr.bf16.mxu0 0
  %1412 = vmatpush1.bf16.msra.mxu0 0
  %1413 = vmatprep.subr.bf16.mxu0 0
  %1414 = vmatpush1.bf16.msra.mxu0 0
  %1415 = vmatprep.subr.bf16.mxu0 0
  %1416 = vmatpush1.bf16.msra.mxu0 0
  %1417 = vmatprep.subr.bf16.mxu0 0
  %1418 = vmatpush1.bf16.msra.mxu0 0
  %1419 = vmatprep.subr.bf16.mxu0 0
  %1420 = vmatpush1.bf16.msra.mxu0 0
  %1421 = vmatprep.subr.bf16.mxu0 0
  %1422 = vmatpush1.bf16.msra.mxu0 0
  %1423 = vmatprep.subr.bf16.mxu0 0
  %1424 = vmatpush1.bf16.msra.mxu0 0
  %1425 = vmatprep.subr.bf16.mxu0 0
  %1426 = vmatpush1.bf16.msra.mxu0 0
  %1427 = vmatprep.mubr.bf16.mxu0 0
  %1428 = vmatmul.mubr.bf16.gmra.mrb[0].mxu0 %v1348
  %v1429 = vpop.f32.mrb[0].mxu0
  %v1430 = vadd.f32 0.0, %v1429
  %v1431 = vpop.f32.mrb[0].mxu0
  %v1432 = vadd.f32 0.0, %v1431
  %v1433 = vpop.f32.mrb[0].mxu0
  %v1434 = vpop.f32.mrb[0].mxu0
  %1435 = vdwg.mxu0
  %v1436 = vadd.f32 %v1350, %v1389
  %v1437 = vadd.f32 %v1351, %v1391
  %v1438 = vadd.f32 %v1352, %v1430
  %v1439 = vadd.f32 %v1353, %v1432
  %v1440 = vxor.u32 %v1436, 2147483648
  %v1441 = vmul.f32 %v1440, 1.442695
  %v1442 = vpow.pop %v1441
  %v1443 = vadd.f32 %v1442, 1.0
  %v1444 = vrcp.pop %v1443
  %v1445 = vmul.f32 1.0, %v1444
  %v1446 = vxor.u32 %v1437, 2147483648
  %v1447 = vmul.f32 %v1446, 1.442695
  %v1448 = vpow.pop %v1447
  %v1449 = vadd.f32 %v1448, 1.0
  %v1450 = vrcp.pop %v1449
  %v1451 = vmul.f32 1.0, %v1450
  %v1452 = vtanh.pop %v1438
  %v1453 = vxor.u32 %v1439, 2147483648
  %v1454 = vmul.f32 %v1453, 1.442695
  %v1455 = vpow.pop %v1454
  %v1456 = vadd.f32 %v1455, 1.0
  %v1457 = vrcp.pop %v1456
  %v1458 = vmul.f32 1.0, %v1457
  %v1459 = vmul.f32 %v1451, %v1345
  %v1460 = vmul.f32 %v1445, %v1452
  %v1461 = vadd.f32 %v1459, %v1460
  %v1462 = vtanh.pop %v1461
  %v1463 = vmul.f32 %v1458, %v1462
  %v1464 = vpack.c.bf16 %v1463, %v1463
  %s1465 = scalar_lea.vmem [#allocation4], 224
  %v1466 = vld [vmem:[%s1465] sm:$0xff]
  %v1467 = vld [vmem:[%s1465 + $0x8] sm:$0xff]
  %v1468 = vld [vmem:[%s1465 + $0x10] sm:$0xff]
  %v1469 = vld [vmem:[%s1465 + $0x18] sm:$0xff]
  %1470 = vmatprep.subr.bf16.mxu0 %v595
  %1471 = vmatpush1.bf16.msra.mxu0 %v594
  %1472 = vmatprep.subr.bf16.mxu0 %v599
  %1473 = vmatpush1.bf16.msra.mxu0 %v598
  %1474 = vmatprep.subr.bf16.mxu0 %v603
  %1475 = vmatpush1.bf16.msra.mxu0 %v602
  %1476 = vmatprep.subr.bf16.mxu0 %v607
  %1477 = vmatpush1.bf16.msra.mxu0 %v606
  %1478 = vmatprep.subr.bf16.mxu0 %v611
  %1479 = vmatpush1.bf16.msra.mxu0 %v610
  %1480 = vmatprep.subr.bf16.mxu0 %v615
  %1481 = vmatpush1.bf16.msra.mxu0 %v614
  %1482 = vmatprep.subr.bf16.mxu0 %v619
  %1483 = vmatpush1.bf16.msra.mxu0 %v618
  %1484 = vmatprep.subr.bf16.mxu0 %v623
  %1485 = vmatpush1.bf16.msra.mxu0 %v622
  %1486 = vmatprep.subr.bf16.mxu0 0
  %1487 = vmatpush1.bf16.msra.mxu0 0
  %1488 = vmatprep.subr.bf16.mxu0 0
  %1489 = vmatpush1.bf16.msra.mxu0 0
  %1490 = vmatprep.subr.bf16.mxu0 0
  %1491 = vmatpush1.bf16.msra.mxu0 0
  %1492 = vmatprep.subr.bf16.mxu0 0
  %1493 = vmatpush1.bf16.msra.mxu0 0
  %1494 = vmatprep.subr.bf16.mxu0 0
  %1495 = vmatpush1.bf16.msra.mxu0 0
  %1496 = vmatprep.subr.bf16.mxu0 0
  %1497 = vmatpush1.bf16.msra.mxu0 0
  %1498 = vmatprep.subr.bf16.mxu0 0
  %1499 = vmatpush1.bf16.msra.mxu0 0
  %1500 = vmatprep.subr.bf16.mxu0 0
  %1501 = vmatpush1.bf16.msra.mxu0 0
  %1502 = vmatprep.mubr.bf16.mxu0 0
  %1503 = vmatmul.mubr.bf16.gmra.mrb[0].mxu0 %v1464
  %v1504 = vpop.f32.mrb[0].mxu0
  %v1505 = vadd.f32 0.0, %v1504
  %v1506 = vpop.f32.mrb[0].mxu0
  %v1507 = vadd.f32 0.0, %v1506
  %v1508 = vpop.f32.mrb[0].mxu0
  %v1509 = vpop.f32.mrb[0].mxu0
  %1510 = vdwg.mxu0
  %1511 = vmatprep.subr.bf16.mxu0 %v597
  %1512 = vmatpush1.bf16.msra.mxu0 %v596
  %1513 = vmatprep.subr.bf16.mxu0 %v601
  %1514 = vmatpush1.bf16.msra.mxu0 %v600
  %1515 = vmatprep.subr.bf16.mxu0 %v605
  %1516 = vmatpush1.bf16.msra.mxu0 %v604
  %1517 = vmatprep.subr.bf16.mxu0 %v609
  %1518 = vmatpush1.bf16.msra.mxu0 %v608
  %1519 = vmatprep.subr.bf16.mxu0 %v613
  %1520 = vmatpush1.bf16.msra.mxu0 %v612
  %1521 = vmatprep.subr.bf16.mxu0 %v617
  %1522 = vmatpush1.bf16.msra.mxu0 %v616
  %1523 = vmatprep.subr.bf16.mxu0 %v621
  %1524 = vmatpush1.bf16.msra.mxu0 %v620
  %1525 = vmatprep.subr.bf16.mxu0 %v625
  %1526 = vmatpush1.bf16.msra.mxu0 %v624
  %1527 = vmatprep.subr.bf16.mxu0 0
  %1528 = vmatpush1.bf16.msra.mxu0 0
  %1529 = vmatprep.subr.bf16.mxu0 0
  %1530 = vmatpush1.bf16.msra.mxu0 0
  %1531 = vmatprep.subr.bf16.mxu0 0
  %1532 = vmatpush1.bf16.msra.mxu0 0
  %1533 = vmatprep.subr.bf16.mxu0 0
  %1534 = vmatpush1.bf16.msra.mxu0 0
  %1535 = vmatprep.subr.bf16.mxu0 0
  %1536 = vmatpush1.bf16.msra.mxu0 0
  %1537 = vmatprep.subr.bf16.mxu0 0
  %1538 = vmatpush1.bf16.msra.mxu0 0
  %1539 = vmatprep.subr.bf16.mxu0 0
  %1540 = vmatpush1.bf16.msra.mxu0 0
  %1541 = vmatprep.subr.bf16.mxu0 0
  %1542 = vmatpush1.bf16.msra.mxu0 0
  %1543 = vmatprep.mubr.bf16.mxu0 0
  %1544 = vmatmul.mubr.bf16.gmra.mrb[0].mxu0 %v1464
  %v1545 = vpop.f32.mrb[0].mxu0
  %v1546 = vadd.f32 0.0, %v1545
  %v1547 = vpop.f32.mrb[0].mxu0
  %v1548 = vadd.f32 0.0, %v1547
  %v1549 = vpop.f32.mrb[0].mxu0
  %v1550 = vpop.f32.mrb[0].mxu0
  %1551 = vdwg.mxu0
  %v1552 = vadd.f32 %v1466, %v1505
  %v1553 = vadd.f32 %v1467, %v1507
  %v1554 = vadd.f32 %v1468, %v1546
  %v1555 = vadd.f32 %v1469, %v1548
  %v1556 = vxor.u32 %v1552, 2147483648
  %v1557 = vmul.f32 %v1556, 1.442695
  %v1558 = vpow.pop %v1557
  %v1559 = vadd.f32 %v1558, 1.0
  %v1560 = vrcp.pop %v1559
  %v1561 = vmul.f32 1.0, %v1560
  %v1562 = vxor.u32 %v1553, 2147483648
  %v1563 = vmul.f32 %v1562, 1.442695
  %v1564 = vpow.pop %v1563
  %v1565 = vadd.f32 %v1564, 1.0
  %v1566 = vrcp.pop %v1565
  %v1567 = vmul.f32 1.0, %v1566
  %v1568 = vtanh.pop %v1554
  %v1569 = vxor.u32 %v1555, 2147483648
  %v1570 = vmul.f32 %v1569, 1.442695
  %v1571 = vpow.pop %v1570
  %v1572 = vadd.f32 %v1571, 1.0
  %v1573 = vrcp.pop %v1572
  %v1574 = vmul.f32 1.0, %v1573
  %v1575 = vmul.f32 %v1567, %v1461
  %v1576 = vmul.f32 %v1561, %v1568
  %v1577 = vadd.f32 %v1575, %v1576
  %v1578 = vtanh.pop %v1577
  %v1579 = vmul.f32 %v1574, %v1578
  %v1580 = vpack.c.bf16 %v1579, %v1579
  %1581 = vst [vmem:[#allocation2] sm:$0xf] %v1580
  %1582 = vst [vmem:[#allocation3] sm:$0xff] %v1577
  // Predicated region
  $region38: #{action_lstm_forward.1} parent=0 // pred_check
    %p1583 = pneg %p30
  $region39: #{action_lstm_forward.1} parent=0 // pred_check_branch
    %1585 = sbr.rel (%p1583) target = $region41
  $region40: #{action_lstm_forward.1} parent=0 // pred_region
    %v1586 = vld [vmem:[#allocation2] sm:$0xf]
    %v1587 = vld [vmem:[%s4] sm:$0xf]
    %v1588 = vld [vmem:[%s4 + $0x4] sm:$0xf]
    %v1589 = vld [vmem:[%s4 + $0x8] sm:$0xf]
    %v1590 = vld [vmem:[%s4 + $0xc] sm:$0xf]
    %v1591 = vld [vmem:[%s4 + $0x10] sm:$0xf]
    %v1592 = vld [vmem:[%s4 + $0x14] sm:$0xf]
    %v1593 = vld [vmem:[%s4 + $0x18] sm:$0xf]
    %v1594 = vld [vmem:[%s4 + $0x1c] sm:$0xf]
    %v1595 = vld [vmem:[%s4 + $0x20] sm:$0xf]
    %v1596 = vld [vmem:[%s4 + $0x24] sm:$0xf]
    %v1597 = vld [vmem:[%s4 + $0x28] sm:$0xf]
    %v1598 = vld [vmem:[%s4 + $0x2c] sm:$0xf]
    %v1599 = vld [vmem:[%s4 + $0x30] sm:$0xf]
    %v1600 = vld [vmem:[%s4 + $0x34] sm:$0xf]
    %v1601 = vld [vmem:[%s4 + $0x38] sm:$0xf]
    %v1602 = vld [vmem:[%s4 + $0x3c] sm:$0xf]
    %v1603 = vld [vmem:[%s5] sm:$0x1]
    %v1605 = vlaneseq
    %v1606 = vshrl.u32 %v1605, 7
    %v1607 = vsub.s32 0, %v1606
    %v1608 = vrot.slane %v1603, %v1607
    %v1626 = vunpack.c.l.b16 %v1587
    %v1627 = vunpack.c.l.b16 %v1588
    %v1628 = vunpack.c.l.b16 %v1589
    %v1629 = vunpack.c.l.b16 %v1590
    %v1630 = vunpack.c.l.b16 %v1591
    %v1631 = vunpack.c.l.b16 %v1592
    %v1632 = vunpack.c.l.b16 %v1593
    %v1633 = vunpack.c.l.b16 %v1594
    %v1634 = vunpack.c.l.b16 %v1595
    %v1635 = vunpack.c.l.b16 %v1596
    %v1636 = vunpack.c.l.b16 %v1597
    %v1637 = vunpack.c.l.b16 %v1598
    %v1638 = vunpack.c.l.b16 %v1599
    %v1639 = vunpack.c.l.b16 %v1600
    %v1640 = vunpack.c.l.b16 %v1601
    %v1641 = vunpack.c.l.b16 %v1602
    %v1642 = vpack.c.b16 %v1627, %v1626
    %v1643 = vpack.c.b16 %v1629, %v1628
    %v1644 = vpack.c.b16 %v1631, %v1630
    %v1645 = vpack.c.b16 %v1633, %v1632
    %v1646 = vpack.c.b16 %v1635, %v1634
    %v1647 = vpack.c.b16 %v1637, %v1636
    %v1648 = vpack.c.b16 %v1639, %v1638
    %v1649 = vpack.c.b16 %v1641, %v1640
    %1658 = vmatprep.subr.bf16.mxu0 0
    %1659 = vmatpush1.bf16.msra.mxu0 %v1642
    %1660 = vmatprep.subr.bf16.mxu0 0
    %1661 = vmatpush1.bf16.msra.mxu0 %v1643
    %1662 = vmatprep.subr.bf16.mxu0 0
    %1663 = vmatpush1.bf16.msra.mxu0 %v1644
    %1664 = vmatprep.subr.bf16.mxu0 0
    %1665 = vmatpush1.bf16.msra.mxu0 %v1645
    %1666 = vmatprep.subr.bf16.mxu0 0
    %1667 = vmatpush1.bf16.msra.mxu0 %v1646
    %1668 = vmatprep.subr.bf16.mxu0 0
    %1669 = vmatpush1.bf16.msra.mxu0 %v1647
    %1670 = vmatprep.subr.bf16.mxu0 0
    %1671 = vmatpush1.bf16.msra.mxu0 %v1648
    %1672 = vmatprep.subr.bf16.mxu0 0
    %1673 = vmatpush1.bf16.msra.mxu0 %v1649
    %1674 = vmatprep.subr.bf16.mxu0 0
    %1675 = vmatpush1.bf16.msra.mxu0 0
    %1676 = vmatprep.subr.bf16.mxu0 0
    %1677 = vmatpush1.bf16.msra.mxu0 0
    %1678 = vmatprep.subr.bf16.mxu0 0
    %1679 = vmatpush1.bf16.msra.mxu0 0
    %1680 = vmatprep.subr.bf16.mxu0 0
    %1681 = vmatpush1.bf16.msra.mxu0 0
    %1682 = vmatprep.subr.bf16.mxu0 0
    %1683 = vmatpush1.bf16.msra.mxu0 0
    %1684 = vmatprep.subr.bf16.mxu0 0
    %1685 = vmatpush1.bf16.msra.mxu0 0
    %1686 = vmatprep.subr.bf16.mxu0 0
    %1687 = vmatpush1.bf16.msra.mxu0 0
    %1688 = vmatprep.subr.bf16.mxu0 0
    %1689 = vmatpush1.bf16.msra.mxu0 0
    %1690 = vmatprep.mubr.bf16.mxu0 0
    %1691 = vmatmul.mubr.bf16.gmra.mrb[0].mxu0 %v1586
    %v1692 = vpop.f32.mrb[0].mxu0
    %v1693 = vadd.f32 %v1608, %v1692
    %v1694 = vpop.f32.mrb[0].mxu0
    %v1695 = vpop.f32.mrb[0].mxu0
    %v1696 = vpop.f32.mrb[0].mxu0
    %1697 = vdwg.mxu0
    %v1698 = vmax.f32 %v1693, 0.0
    %v1699 = vpack.c.bf16 %v1698, %v1698
    %v1700 = vld [vmem:[%s6] sm:$0xf]
    %v1701 = vld [vmem:[%s6 + $0x4] sm:$0xf]
    %v1702 = vld [vmem:[%s6 + $0x8] sm:$0xf]
    %v1703 = vld [vmem:[%s6 + $0xc] sm:$0xf]
    %v1704 = vld [vmem:[%s6 + $0x10] sm:$0xf]
    %v1705 = vld [vmem:[%s6 + $0x14] sm:$0xf]
    %v1706 = vld [vmem:[%s6 + $0x18] sm:$0xf]
    %v1707 = vld [vmem:[%s6 + $0x1c] sm:$0xf]
    %v1708 = vld [vmem:[%s6 + $0x20] sm:$0xf]
    %v1709 = vld [vmem:[%s6 + $0x24] sm:$0xf]
    %v1710 = vld [vmem:[%s6 + $0x28] sm:$0xf]
    %v1711 = vld [vmem:[%s6 + $0x2c] sm:$0xf]
    %v1712 = vld [vmem:[%s6 + $0x30] sm:$0xf]
    %v1713 = vld [vmem:[%s6 + $0x34] sm:$0xf]
    %v1714 = vld [vmem:[%s6 + $0x38] sm:$0xf]
    %v1715 = vld [vmem:[%s6 + $0x3c] sm:$0xf]
    %v1716 = vld [vmem:[%s7] sm:$0x1]
    %v1718 = vlaneseq
    %v1719 = vshrl.u32 %v1718, 7
    %v1720 = vsub.s32 0, %v1719
    %v1721 = vrot.slane %v1716, %v1720
    %v1739 = vunpack.c.l.b16 %v1700
    %v1740 = vunpack.c.l.b16 %v1701
    %v1741 = vunpack.c.l.b16 %v1702
    %v1742 = vunpack.c.l.b16 %v1703
    %v1743 = vunpack.c.l.b16 %v1704
    %v1744 = vunpack.c.l.b16 %v1705
    %v1745 = vunpack.c.l.b16 %v1706
    %v1746 = vunpack.c.l.b16 %v1707
    %v1747 = vunpack.c.l.b16 %v1708
    %v1748 = vunpack.c.l.b16 %v1709
    %v1749 = vunpack.c.l.b16 %v1710
    %v1750 = vunpack.c.l.b16 %v1711
    %v1751 = vunpack.c.l.b16 %v1712
    %v1752 = vunpack.c.l.b16 %v1713
    %v1753 = vunpack.c.l.b16 %v1714
    %v1754 = vunpack.c.l.b16 %v1715
    %v1755 = vpack.c.b16 %v1740, %v1739
    %v1756 = vpack.c.b16 %v1742, %v1741
    %v1757 = vpack.c.b16 %v1744, %v1743
    %v1758 = vpack.c.b16 %v1746, %v1745
    %v1759 = vpack.c.b16 %v1748, %v1747
    %v1760 = vpack.c.b16 %v1750, %v1749
    %v1761 = vpack.c.b16 %v1752, %v1751
    %v1762 = vpack.c.b16 %v1754, %v1753
    %1771 = vmatprep.subr.bf16.mxu0 0
    %1772 = vmatpush1.bf16.msra.mxu0 %v1755
    %1773 = vmatprep.subr.bf16.mxu0 0
    %1774 = vmatpush1.bf16.msra.mxu0 %v1756
    %1775 = vmatprep.subr.bf16.mxu0 0
    %1776 = vmatpush1.bf16.msra.mxu0 %v1757
    %1777 = vmatprep.subr.bf16.mxu0 0
    %1778 = vmatpush1.bf16.msra.mxu0 %v1758
    %1779 = vmatprep.subr.bf16.mxu0 0
    %1780 = vmatpush1.bf16.msra.mxu0 %v1759
    %1781 = vmatprep.subr.bf16.mxu0 0
    %1782 = vmatpush1.bf16.msra.mxu0 %v1760
    %1783 = vmatprep.subr.bf16.mxu0 0
    %1784 = vmatpush1.bf16.msra.mxu0 %v1761
    %1785 = vmatprep.subr.bf16.mxu0 0
    %1786 = vmatpush1.bf16.msra.mxu0 %v1762
    %1787 = vmatprep.subr.bf16.mxu0 0
    %1788 = vmatpush1.bf16.msra.mxu0 0
    %1789 = vmatprep.subr.bf16.mxu0 0
    %1790 = vmatpush1.bf16.msra.mxu0 0
    %1791 = vmatprep.subr.bf16.mxu0 0
    %1792 = vmatpush1.bf16.msra.mxu0 0
    %1793 = vmatprep.subr.bf16.mxu0 0
    %1794 = vmatpush1.bf16.msra.mxu0 0
    %1795 = vmatprep.subr.bf16.mxu0 0
    %1796 = vmatpush1.bf16.msra.mxu0 0
    %1797 = vmatprep.subr.bf16.mxu0 0
    %1798 = vmatpush1.bf16.msra.mxu0 0
    %1799 = vmatprep.subr.bf16.mxu0 0
    %1800 = vmatpush1.bf16.msra.mxu0 0
    %1801 = vmatprep.subr.bf16.mxu0 0
    %1802 = vmatpush1.bf16.msra.mxu0 0
    %1803 = vmatprep.mubr.bf16.mxu0 0
    %1804 = vmatmul.mubr.bf16.gmra.mrb[0].mxu0 %v1699
    %v1805 = vpop.f32.mrb[0].mxu0
    %v1806 = vadd.f32 %v1721, %v1805
    %v1807 = vpop.f32.mrb[0].mxu0
    %v1808 = vpop.f32.mrb[0].mxu0
    %v1809 = vpop.f32.mrb[0].mxu0
    %1810 = vdwg.mxu0
    %1811 = vst [vmem:[%s8] sm:$0xff] %v1806
  $region41: #{action_lstm_forward.1} parent=0 // pred_fallthru
    _
  // Predicated region
  $region42: #{action_lstm_forward.1} parent=0 // pred_check
    _
  $region43: #{action_lstm_forward.1} parent=0 // pred_check_branch
    %1813 = sbr.rel (0) target = $region45
  $region44: #{action_lstm_forward.1} parent=0 // pred_region
    _
  $region45: #{action_lstm_forward.1} parent=0 // pred_fallthru
    _
  // Predicated region
  $region46: #{action_lstm_forward.1} parent=0 // pred_check
    _
  $region47: #{action_lstm_forward.1} parent=0 // pred_check_branch
    %1815 = sbr.rel (0) target = $region49
  $region48: #{action_lstm_forward.1} parent=0 // pred_region
    _
  $region49: #{action_lstm_forward.1} parent=0 // pred_fallthru
    _

</llo_original>
